<compile_context>
chip_gen: v7x
topology: tpu7x:2x2x1
jax: 0.10.0
libtpu: 0.0.40
codegen_flags: <defaults>
</compile_context>

<pallas_src>
import functools

import jax
import jax.numpy as jnp
from jax.experimental import pallas as pl
from jax.experimental.pallas import tpu as pltpu


CONNECTED_LAYER_SIZES = (8, 32, 16, 4)   # base-model feature dim -> hidden -> ... -> out


# ------------------------------- fused kernel --------------------------------

def _conv3x3_im2col(src_ref, slab_ref, w_ref, b_ref, *, cin, Np, Wp):
    """3x3 'same' conv as ONE im2col matmul, channel-major, entirely in VMEM.

    src_ref  : (cin, Np + 2*(Wp+1))  flat zero-padded activations, extended by
               Wp+1 lanes on each side so every tap is a constant-offset slice
    slab_ref : (>= 9*cin, Np)        im2col scratch (rows t*cin..t*cin+cin-1 = tap t)
    w_ref    : (cout, 9*cin)         tap-major transposed conv weight
    b_ref    : (cout, 1)             bias
    returns  : (cout, Np) f32        pre-activation on the padded grid
               (border columns are garbage; caller masks them)
    """
    for t in range(9):
        dh, dw = divmod(t, 3)
        o = dh * Wp + dw                                # constant lane offset of tap t
        slab_ref[t * cin:(t + 1) * cin, :] = src_ref[:, o:o + Np]
    return jnp.dot(w_ref[...], slab_ref[0:9 * cin, :],
                   preferred_element_type=jnp.float32) + b_ref[...]


def _custom_resnet_kernel(x_ext_ref, mask_ref,
                          w_stem_ref, b_stem_ref,
                          w_blk1_ref, b_blk1_ref,
                          w_blk2_ref, b_blk2_ref,
                          *rest, B, H, W, cp, ch, n_fc):
    fc_refs = rest[:2 * n_fc]          # alternating (weight, bias) refs
    out_ref = rest[2 * n_fc]           # (out_features, B)
    act_ref = rest[2 * n_fc + 1]       # (ch, Np + 2*ext) flat padded activation scratch
    slab_ref = rest[2 * n_fc + 2]      # (9*max(cp,ch), Np) im2col scratch

    Hp, Wp = H + 2, W + 2
    HpWp = Hp * Wp
    Np = B * HpWp
    ext = Wp + 1

    # Interior mask of the padded grid, broadcast once (hoisted, reused 3x).
    keep = jnp.broadcast_to(mask_ref[...] > 0.0, (ch, Np))

    # ---- base_model: stem conv + ReLU (borders re-zeroed => exact 'same' pad) ----
    h1 = jnp.where(
        keep,
        jnp.maximum(_conv3x3_im2col(x_ext_ref, slab_ref, w_stem_ref, b_stem_ref,
                                    cin=cp, Np=Np, Wp=Wp), 0.0),
        0.0)                                                     # (ch, Np), live value

    # ---- base_model: residual block (conv -> ReLU -> conv, +skip, ReLU) ---------
    act_ref[...] = jnp.zeros_like(act_ref)                       # zero extension once
    act_ref[:, ext:ext + Np] = h1
    h2 = jnp.where(
        keep,
        jnp.maximum(_conv3x3_im2col(act_ref, slab_ref, w_blk1_ref, b_blk1_ref,
                                    cin=ch, Np=Np, Wp=Wp), 0.0),
        0.0)
    act_ref[:, ext:ext + Np] = h2
    h3 = _conv3x3_im2col(act_ref, slab_ref, w_blk2_ref, b_blk2_ref,
                         cin=ch, Np=Np, Wp=Wp)
    h = jnp.where(keep, jnp.maximum(h1 + h3, 0.0), 0.0)          # (ch, Np)

    # ---- base_model: global average pool (per-batch cross-lane sum, no pool matrix)
    inv = 1.0 / float(H * W)
    cols = [jnp.sum(h[:, b * HpWp:(b + 1) * HpWp], axis=-1, keepdims=True) * inv
            for b in range(B)]
    z = jnp.concatenate(cols, axis=-1) if B > 1 else cols[0]     # (ch, B)

    # ---- connected_model: Linear followed by ReLU for EVERY layer (as in spec) ---
    for i in range(n_fc):
        w = fc_refs[2 * i][...]                                  # (out, in)
        b = fc_refs[2 * i + 1][...]                              # (out, 1)
        z = jnp.maximum(jnp.dot(w, z, preferred_element_type=jnp.float32) + b, 0.0)

    out_ref[...] = z.astype(out_ref.dtype)                       # (out_features, B)


# ------------------------------- JAX wrapper ----------------------------------

def init_params(key, cin=4, ch=8, sizes=CONNECTED_LAYER_SIZES):
    n_fc = len(sizes) - 1
    ks = jax.random.split(key, 6 + 2 * n_fc)
    s = 0.1
    # conv weights in HWIO = PyTorch OIHW weight.transpose(2, 3, 1, 0)
    p = {
        "stem_w": s * jax.random.normal(ks[0], (3, 3, cin, ch), jnp.float32),
        "stem_b": s * jax.random.normal(ks[1], (ch,), jnp.float32),
        "blk1_w": s * jax.random.normal(ks[2], (3, 3, ch, ch), jnp.float32),
        "blk1_b": s * jax.random.normal(ks[3], (ch,), jnp.float32),
        "blk2_w": s * jax.random.normal(ks[4], (3, 3, ch, ch), jnp.float32),
        "blk2_b": s * jax.random.normal(ks[5], (ch,), jnp.float32),
        "fc": [],
    }
    for i in range(n_fc):
        wk, bk = ks[6 + 2 * i], ks[7 + 2 * i]
        # nn.Linear layout: weight (out_features, in_features) -- exactly what the
        # (features, B)-oriented kernel consumes, so no in-kernel transpose.
        p["fc"].append(
            (s * jax.random.normal(wk, (sizes[i + 1], sizes[i]), jnp.float32),
             s * jax.random.normal(bk, (sizes[i + 1],), jnp.float32)))
    return p


def _conv_w2d(w_hwio, cin_pad):
    """HWIO conv weight -> lane-dense (cout, 9*cin_pad), tap-major rows."""
    kh, kw, ci, co = w_hwio.shape
    w = jnp.pad(w_hwio, ((0, 0), (0, 0), (0, cin_pad - ci), (0, 0)))
    return jnp.transpose(w, (3, 0, 1, 2)).reshape(co, kh * kw * cin_pad)


def custom_resnet_forward(params, x_nchw, sizes=CONNECTED_LAYER_SIZES):
    """Fused forward pass: the whole CustomResnet in one pallas_call."""
    x = x_nchw.astype(jnp.float32)                  # mirrors x.float()
    B, cin, H, W = x.shape
    ch = params["stem_b"].shape[0]
    n_fc = len(sizes) - 1
    assert sizes[0] == ch, "connected_layer_sizes[0] must equal base-model feature dim"
    assert ch % 8 == 0, "channel-major layout assumes ch is a sublane multiple"

    Hp, Wp = H + 2, W + 2
    HpWp = Hp * Wp
    Np = B * HpWp                 # padded-grid flat length (lane axis)
    ext = Wp + 1                  # lane extension so every conv tap is a const-offset slice
    cp = ((cin + 7) // 8) * 8     # pad input channels to a sublane multiple (4 -> 8)

    # Glue (folds into the surrounding jit): channel-major + flat 'same' zero padding.
    x_cm = jnp.transpose(x, (1, 0, 2, 3))                              # (cin, B, H, W)
    x_cm = jnp.pad(x_cm, ((0, cp - cin), (0, 0), (0, 0), (0, 0)))      # (cp,  B, H, W)
    x_pad = jnp.pad(x_cm, ((0, 0), (0, 0), (1, 1), (1, 1)))            # (cp,  B, Hp, Wp)
    x_ext = jnp.pad(x_pad.reshape(cp, Np), ((0, 0), (ext, ext)))       # (cp,  Np + 2*ext)

    # Interior mask of the padded grid (1 inside the HxW image, 0 on padded border).
    ii = jnp.arange(Hp)[:, None]
    jj = jnp.arange(Wp)[None, :]
    m2d = ((ii >= 1) & (ii <= H) & (jj >= 1) & (jj <= W)).astype(jnp.float32)
    mask = jnp.tile(m2d.reshape(1, HpWp), (1, B))                      # (1, Np)

    w_stem = _conv_w2d(params["stem_w"], cp)                           # (ch, 9*cp)
    w_blk1 = _conv_w2d(params["blk1_w"], ch)                           # (ch, 9*ch)
    w_blk2 = _conv_w2d(params["blk2_w"], ch)
    b_stem = params["stem_b"].reshape(ch, 1)
    b_blk1 = params["blk1_b"].reshape(ch, 1)
    b_blk2 = params["blk2_b"].reshape(ch, 1)

    fc_flat = []
    for w, b in params["fc"]:
        fc_flat += [w, b.reshape(-1, 1)]                               # (out,in), (out,1)

    inputs = [x_ext, mask, w_stem, b_stem, w_blk1, b_blk1, w_blk2, b_blk2] + fc_flat
    vmem = pl.BlockSpec(memory_space=pltpu.MemorySpace.VMEM)

    kernel = functools.partial(_custom_resnet_kernel,
                               B=B, H=H, W=W, cp=cp, ch=ch, n_fc=n_fc)
    # Single grid point: at B=2 the kernel is launch/DMA-latency bound.
    # TODO(synk): for large B (esp. v7x's 2 TensorCores) add a batch grid axis with
    #             per-B_blk BlockSpecs + dimension_semantics=("parallel",) and bf16
    #             MXU inputs; VMEM per batch element here is only ~3-10 KB.
    out_t = pl.pallas_call(
        kernel,
        out_shape=jax.ShapeDtypeStruct((sizes[-1], B), jnp.float32),   # (features, B)
        in_specs=[vmem] * len(inputs),
        out_specs=vmem,
        scratch_shapes=[
            pltpu.VMEM((ch, Np + 2 * ext), jnp.float32),               # padded activations
            pltpu.VMEM((9 * max(cp, ch), Np), jnp.float32),            # im2col slab
        ],
    )(*inputs)
    return jnp.transpose(out_t)                                        # (B, features)


# ----------------------------------- main -------------------------------------

if __name__ == "__main__":
    key = jax.random.PRNGKey(0)
    k_img, k_par = jax.random.split(key)
    x_image = jax.random.normal(k_img, (2, 4, 16, 16), dtype=jnp.float32)   # NCHW
    params = init_params(k_par)

    fwd = jax.jit(custom_resnet_forward)
    out = jax.block_until_ready(fwd(params, x_image))
    assert out.shape == (2, 4) and out.dtype == jnp.float32
    assert bool(jnp.all(jnp.isfinite(out)))
    print("KERNEL_OK")
</pallas_src>

<mosaic_0001>
module attributes {stable_mosaic.version = 11 : i64} {
  func.func @_custom_resnet_kernel(%arg0: memref<8x686xf32, #tpu.memory_space<vmem>>, %arg1: memref<1x648xf32, #tpu.memory_space<vmem>>, %arg2: memref<8x72xf32, #tpu.memory_space<vmem>>, %arg3: memref<8x1xf32, #tpu.memory_space<vmem>>, %arg4: memref<8x72xf32, #tpu.memory_space<vmem>>, %arg5: memref<8x1xf32, #tpu.memory_space<vmem>>, %arg6: memref<8x72xf32, #tpu.memory_space<vmem>>, %arg7: memref<8x1xf32, #tpu.memory_space<vmem>>, %arg8: memref<32x8xf32, #tpu.memory_space<vmem>>, %arg9: memref<32x1xf32, #tpu.memory_space<vmem>>, %arg10: memref<16x32xf32, #tpu.memory_space<vmem>>, %arg11: memref<16x1xf32, #tpu.memory_space<vmem>>, %arg12: memref<4x16xf32, #tpu.memory_space<vmem>>, %arg13: memref<4x1xf32, #tpu.memory_space<vmem>>, %arg14: memref<4x2xf32, #tpu.memory_space<vmem>>, %arg15: memref<8x686xf32, #tpu.memory_space<vmem>>, %arg16: memref<72x648xf32, #tpu.memory_space<vmem>>) attributes {dimension_semantics = [], scalar_prefetch = 0 : i64, scratch_operands = 2 : i64, tpu.core_type = #tpu.core_type<tc>} {
    %c0 = arith.constant 0 : index
    %c0_0 = arith.constant 0 : index
    %0 = vector.load %arg1[%c0, %c0_0] : memref<1x648xf32, #tpu.memory_space<vmem>>, vector<1x648xf32>
    %cst = arith.constant 0.000000e+00 : f32
    %1 = vector.broadcast %cst : f32 to vector<1x648xf32>
    %2 = arith.cmpf ogt, %0, %1 : vector<1x648xf32>
    %3 = vector.shape_cast %2 : vector<1x648xi1> to vector<1x648xi1>
    %4 = vector.broadcast %3 : vector<1x648xi1> to vector<8x648xi1>
    %c0_1 = arith.constant 0 : index
    %c0_2 = arith.constant 0 : index
    %5 = vector.load %arg0[%c0_1, %c0_2] : memref<8x686xf32, #tpu.memory_space<vmem>>, vector<8x648xf32>
    %c0_3 = arith.constant 0 : index
    %c0_4 = arith.constant 0 : index
    %6 = vector.load %arg16[%c0_3, %c0_4] : memref<72x648xf32, #tpu.memory_space<vmem>>, vector<8x648xf32>
    tpu.vector_store %arg16[%c0_3, %c0_4], %5 {strides = array<i32>} : memref<72x648xf32, #tpu.memory_space<vmem>>, vector<8x648xf32>,
    %c0_5 = arith.constant 0 : index
    %c1 = arith.constant 1 : index
    %7 = vector.load %arg0[%c0_5, %c1] : memref<8x686xf32, #tpu.memory_space<vmem>>, vector<8x648xf32>
    %c8 = arith.constant 8 : index
    %c0_6 = arith.constant 0 : index
    %8 = vector.load %arg16[%c8, %c0_6] : memref<72x648xf32, #tpu.memory_space<vmem>>, vector<8x648xf32>
    tpu.vector_store %arg16[%c8, %c0_6], %7 {strides = array<i32>} : memref<72x648xf32, #tpu.memory_space<vmem>>, vector<8x648xf32>,
    %c0_7 = arith.constant 0 : index
    %c2 = arith.constant 2 : index
    %9 = vector.load %arg0[%c0_7, %c2] : memref<8x686xf32, #tpu.memory_space<vmem>>, vector<8x648xf32>
    %c16 = arith.constant 16 : index
    %c0_8 = arith.constant 0 : index
    %10 = vector.load %arg16[%c16, %c0_8] : memref<72x648xf32, #tpu.memory_space<vmem>>, vector<8x648xf32>
    tpu.vector_store %arg16[%c16, %c0_8], %9 {strides = array<i32>} : memref<72x648xf32, #tpu.memory_space<vmem>>, vector<8x648xf32>,
    %c0_9 = arith.constant 0 : index
    %c18 = arith.constant 18 : index
    %11 = vector.load %arg0[%c0_9, %c18] : memref<8x686xf32, #tpu.memory_space<vmem>>, vector<8x648xf32>
    %c24 = arith.constant 24 : index
    %c0_10 = arith.constant 0 : index
    %12 = vector.load %arg16[%c24, %c0_10] : memref<72x648xf32, #tpu.memory_space<vmem>>, vector<8x648xf32>
    tpu.vector_store %arg16[%c24, %c0_10], %11 {strides = array<i32>} : memref<72x648xf32, #tpu.memory_space<vmem>>, vector<8x648xf32>,
    %c0_11 = arith.constant 0 : index
    %c19 = arith.constant 19 : index
    %13 = vector.load %arg0[%c0_11, %c19] : memref<8x686xf32, #tpu.memory_space<vmem>>, vector<8x648xf32>
    %c32 = arith.constant 32 : index
    %c0_12 = arith.constant 0 : index
    %14 = vector.load %arg16[%c32, %c0_12] : memref<72x648xf32, #tpu.memory_space<vmem>>, vector<8x648xf32>
    tpu.vector_store %arg16[%c32, %c0_12], %13 {strides = array<i32>} : memref<72x648xf32, #tpu.memory_space<vmem>>, vector<8x648xf32>,
    %c0_13 = arith.constant 0 : index
    %c20 = arith.constant 20 : index
    %15 = vector.load %arg0[%c0_13, %c20] : memref<8x686xf32, #tpu.memory_space<vmem>>, vector<8x648xf32>
    %c40 = arith.constant 40 : index
    %c0_14 = arith.constant 0 : index
    %16 = vector.load %arg16[%c40, %c0_14] : memref<72x648xf32, #tpu.memory_space<vmem>>, vector<8x648xf32>
    tpu.vector_store %arg16[%c40, %c0_14], %15 {strides = array<i32>} : memref<72x648xf32, #tpu.memory_space<vmem>>, vector<8x648xf32>,
    %c0_15 = arith.constant 0 : index
    %c36 = arith.constant 36 : index
    %17 = vector.load %arg0[%c0_15, %c36] : memref<8x686xf32, #tpu.memory_space<vmem>>, vector<8x648xf32>
    %c48 = arith.constant 48 : index
    %c0_16 = arith.constant 0 : index
    %18 = vector.load %arg16[%c48, %c0_16] : memref<72x648xf32, #tpu.memory_space<vmem>>, vector<8x648xf32>
    tpu.vector_store %arg16[%c48, %c0_16], %17 {strides = array<i32>} : memref<72x648xf32, #tpu.memory_space<vmem>>, vector<8x648xf32>,
    %c0_17 = arith.constant 0 : index
    %c37 = arith.constant 37 : index
    %19 = vector.load %arg0[%c0_17, %c37] : memref<8x686xf32, #tpu.memory_space<vmem>>, vector<8x648xf32>
    %c56 = arith.constant 56 : index
    %c0_18 = arith.constant 0 : index
    %20 = vector.load %arg16[%c56, %c0_18] : memref<72x648xf32, #tpu.memory_space<vmem>>, vector<8x648xf32>
    tpu.vector_store %arg16[%c56, %c0_18], %19 {strides = array<i32>} : memref<72x648xf32, #tpu.memory_space<vmem>>, vector<8x648xf32>,
    %c0_19 = arith.constant 0 : index
    %c38 = arith.constant 38 : index
    %21 = vector.load %arg0[%c0_19, %c38] : memref<8x686xf32, #tpu.memory_space<vmem>>, vector<8x648xf32>
    %c64 = arith.constant 64 : index
    %c0_20 = arith.constant 0 : index
    %22 = vector.load %arg16[%c64, %c0_20] : memref<72x648xf32, #tpu.memory_space<vmem>>, vector<8x648xf32>
    tpu.vector_store %arg16[%c64, %c0_20], %21 {strides = array<i32>} : memref<72x648xf32, #tpu.memory_space<vmem>>, vector<8x648xf32>,
    %c0_21 = arith.constant 0 : index
    %c0_22 = arith.constant 0 : index
    %23 = vector.load %arg2[%c0_21, %c0_22] : memref<8x72xf32, #tpu.memory_space<vmem>>, vector<8x72xf32>
    %c0_23 = arith.constant 0 : index
    %c0_24 = arith.constant 0 : index
    %24 = vector.load %arg16[%c0_23, %c0_24] : memref<72x648xf32, #tpu.memory_space<vmem>>, vector<72x648xf32>
    %cst_25 = arith.constant dense<0.000000e+00> : vector<8x648xf32>
    %25 = tpu.matmul %23, %24, %cst_25 {dimension_numbers = #tpu.dot_dimension_numbers<[1], [0], [0], [1], [0, 0, 1, 1], [], []>} : vector<8x72xf32>, vector<72x648xf32>, vector<8x648xf32> -> vector<8x648xf32>
    %c0_26 = arith.constant 0 : index
    %c0_27 = arith.constant 0 : index
    %26 = vector.load %arg3[%c0_26, %c0_27] : memref<8x1xf32, #tpu.memory_space<vmem>>, vector<8x1xf32>
    %27 = vector.broadcast %26 : vector<8x1xf32> to vector<8x648xf32>
    %28 = arith.addf %25, %27 : vector<8x648xf32>
    %cst_28 = arith.constant 0.000000e+00 : f32
    %29 = vector.broadcast %cst_28 : f32 to vector<8x648xf32>
    %30 = arith.maximumf %28, %29 : vector<8x648xf32>
    %cst_29 = arith.constant 0.000000e+00 : f32
    %31 = vector.broadcast %cst_29 : f32 to vector<8x648xf32>
    %32 = arith.select %4, %30, %31 : vector<8x648xi1>, vector<8x648xf32>
    %cst_30 = arith.constant 0.000000e+00 : f32
    %33 = vector.broadcast %cst_30 : f32 to vector<8x686xf32>
    %c0_31 = arith.constant 0 : index
    %c0_32 = arith.constant 0 : index
    %34 = vector.load %arg15[%c0_31, %c0_32] : memref<8x686xf32, #tpu.memory_space<vmem>>, vector<8x686xf32>
    tpu.vector_store %arg15[%c0_31, %c0_32], %33 {strides = array<i32>} : memref<8x686xf32, #tpu.memory_space<vmem>>, vector<8x686xf32>,
    %c0_33 = arith.constant 0 : index
    %c19_34 = arith.constant 19 : index
    %35 = vector.load %arg15[%c0_33, %c19_34] : memref<8x686xf32, #tpu.memory_space<vmem>>, vector<8x648xf32>
    tpu.vector_store %arg15[%c0_33, %c19_34], %32 {strides = array<i32>} : memref<8x686xf32, #tpu.memory_space<vmem>>, vector<8x648xf32>,
    %c0_35 = arith.constant 0 : index
    %c0_36 = arith.constant 0 : index
    %36 = vector.load %arg15[%c0_35, %c0_36] : memref<8x686xf32, #tpu.memory_space<vmem>>, vector<8x648xf32>
    %c0_37 = arith.constant 0 : index
    %c0_38 = arith.constant 0 : index
    %37 = vector.load %arg16[%c0_37, %c0_38] : memref<72x648xf32, #tpu.memory_space<vmem>>, vector<8x648xf32>
    tpu.vector_store %arg16[%c0_37, %c0_38], %36 {strides = array<i32>} : memref<72x648xf32, #tpu.memory_space<vmem>>, vector<8x648xf32>,
    %c0_39 = arith.constant 0 : index
    %c1_40 = arith.constant 1 : index
    %38 = vector.load %arg15[%c0_39, %c1_40] : memref<8x686xf32, #tpu.memory_space<vmem>>, vector<8x648xf32>
    %c8_41 = arith.constant 8 : index
    %c0_42 = arith.constant 0 : index
    %39 = vector.load %arg16[%c8_41, %c0_42] : memref<72x648xf32, #tpu.memory_space<vmem>>, vector<8x648xf32>
    tpu.vector_store %arg16[%c8_41, %c0_42], %38 {strides = array<i32>} : memref<72x648xf32, #tpu.memory_space<vmem>>, vector<8x648xf32>,
    %c0_43 = arith.constant 0 : index
    %c2_44 = arith.constant 2 : index
    %40 = vector.load %arg15[%c0_43, %c2_44] : memref<8x686xf32, #tpu.memory_space<vmem>>, vector<8x648xf32>
    %c16_45 = arith.constant 16 : index
    %c0_46 = arith.constant 0 : index
    %41 = vector.load %arg16[%c16_45, %c0_46] : memref<72x648xf32, #tpu.memory_space<vmem>>, vector<8x648xf32>
    tpu.vector_store %arg16[%c16_45, %c0_46], %40 {strides = array<i32>} : memref<72x648xf32, #tpu.memory_space<vmem>>, vector<8x648xf32>,
    %c0_47 = arith.constant 0 : index
    %c18_48 = arith.constant 18 : index
    %42 = vector.load %arg15[%c0_47, %c18_48] : memref<8x686xf32, #tpu.memory_space<vmem>>, vector<8x648xf32>
    %c24_49 = arith.constant 24 : index
    %c0_50 = arith.constant 0 : index
    %43 = vector.load %arg16[%c24_49, %c0_50] : memref<72x648xf32, #tpu.memory_space<vmem>>, vector<8x648xf32>
    tpu.vector_store %arg16[%c24_49, %c0_50], %42 {strides = array<i32>} : memref<72x648xf32, #tpu.memory_space<vmem>>, vector<8x648xf32>,
    %c0_51 = arith.constant 0 : index
    %c19_52 = arith.constant 19 : index
    %44 = vector.load %arg15[%c0_51, %c19_52] : memref<8x686xf32, #tpu.memory_space<vmem>>, vector<8x648xf32>
    %c32_53 = arith.constant 32 : index
    %c0_54 = arith.constant 0 : index
    %45 = vector.load %arg16[%c32_53, %c0_54] : memref<72x648xf32, #tpu.memory_space<vmem>>, vector<8x648xf32>
    tpu.vector_store %arg16[%c32_53, %c0_54], %44 {strides = array<i32>} : memref<72x648xf32, #tpu.memory_space<vmem>>, vector<8x648xf32>,
    %c0_55 = arith.constant 0 : index
    %c20_56 = arith.constant 20 : index
    %46 = vector.load %arg15[%c0_55, %c20_56] : memref<8x686xf32, #tpu.memory_space<vmem>>, vector<8x648xf32>
    %c40_57 = arith.constant 40 : index
    %c0_58 = arith.constant 0 : index
    %47 = vector.load %arg16[%c40_57, %c0_58] : memref<72x648xf32, #tpu.memory_space<vmem>>, vector<8x648xf32>
    tpu.vector_store %arg16[%c40_57, %c0_58], %46 {strides = array<i32>} : memref<72x648xf32, #tpu.memory_space<vmem>>, vector<8x648xf32>,
    %c0_59 = arith.constant 0 : index
    %c36_60 = arith.constant 36 : index
    %48 = vector.load %arg15[%c0_59, %c36_60] : memref<8x686xf32, #tpu.memory_space<vmem>>, vector<8x648xf32>
    %c48_61 = arith.constant 48 : index
    %c0_62 = arith.constant 0 : index
    %49 = vector.load %arg16[%c48_61, %c0_62] : memref<72x648xf32, #tpu.memory_space<vmem>>, vector<8x648xf32>
    tpu.vector_store %arg16[%c48_61, %c0_62], %48 {strides = array<i32>} : memref<72x648xf32, #tpu.memory_space<vmem>>, vector<8x648xf32>,
    %c0_63 = arith.constant 0 : index
    %c37_64 = arith.constant 37 : index
    %50 = vector.load %arg15[%c0_63, %c37_64] : memref<8x686xf32, #tpu.memory_space<vmem>>, vector<8x648xf32>
    %c56_65 = arith.constant 56 : index
    %c0_66 = arith.constant 0 : index
    %51 = vector.load %arg16[%c56_65, %c0_66] : memref<72x648xf32, #tpu.memory_space<vmem>>, vector<8x648xf32>
    tpu.vector_store %arg16[%c56_65, %c0_66], %50 {strides = array<i32>} : memref<72x648xf32, #tpu.memory_space<vmem>>, vector<8x648xf32>,
    %c0_67 = arith.constant 0 : index
    %c38_68 = arith.constant 38 : index
    %52 = vector.load %arg15[%c0_67, %c38_68] : memref<8x686xf32, #tpu.memory_space<vmem>>, vector<8x648xf32>
    %c64_69 = arith.constant 64 : index
    %c0_70 = arith.constant 0 : index
    %53 = vector.load %arg16[%c64_69, %c0_70] : memref<72x648xf32, #tpu.memory_space<vmem>>, vector<8x648xf32>
    tpu.vector_store %arg16[%c64_69, %c0_70], %52 {strides = array<i32>} : memref<72x648xf32, #tpu.memory_space<vmem>>, vector<8x648xf32>,
    %c0_71 = arith.constant 0 : index
    %c0_72 = arith.constant 0 : index
    %54 = vector.load %arg4[%c0_71, %c0_72] : memref<8x72xf32, #tpu.memory_space<vmem>>, vector<8x72xf32>
    %c0_73 = arith.constant 0 : index
    %c0_74 = arith.constant 0 : index
    %55 = vector.load %arg16[%c0_73, %c0_74] : memref<72x648xf32, #tpu.memory_space<vmem>>, vector<72x648xf32>
    %cst_75 = arith.constant dense<0.000000e+00> : vector<8x648xf32>
    %56 = tpu.matmul %54, %55, %cst_75 {dimension_numbers = #tpu.dot_dimension_numbers<[1], [0], [0], [1], [0, 0, 1, 1], [], []>} : vector<8x72xf32>, vector<72x648xf32>, vector<8x648xf32> -> vector<8x648xf32>
    %c0_76 = arith.constant 0 : index
    %c0_77 = arith.constant 0 : index
    %57 = vector.load %arg5[%c0_76, %c0_77] : memref<8x1xf32, #tpu.memory_space<vmem>>, vector<8x1xf32>
    %58 = vector.broadcast %57 : vector<8x1xf32> to vector<8x648xf32>
    %59 = arith.addf %56, %58 : vector<8x648xf32>
    %cst_78 = arith.constant 0.000000e+00 : f32
    %60 = vector.broadcast %cst_78 : f32 to vector<8x648xf32>
    %61 = arith.maximumf %59, %60 : vector<8x648xf32>
    %cst_79 = arith.constant 0.000000e+00 : f32
    %62 = vector.broadcast %cst_79 : f32 to vector<8x648xf32>
    %63 = arith.select %4, %61, %62 : vector<8x648xi1>, vector<8x648xf32>
    %c0_80 = arith.constant 0 : index
    %c19_81 = arith.constant 19 : index
    %64 = vector.load %arg15[%c0_80, %c19_81] : memref<8x686xf32, #tpu.memory_space<vmem>>, vector<8x648xf32>
    tpu.vector_store %arg15[%c0_80, %c19_81], %63 {strides = array<i32>} : memref<8x686xf32, #tpu.memory_space<vmem>>, vector<8x648xf32>,
    %c0_82 = arith.constant 0 : index
    %c0_83 = arith.constant 0 : index
    %65 = vector.load %arg15[%c0_82, %c0_83] : memref<8x686xf32, #tpu.memory_space<vmem>>, vector<8x648xf32>
    %c0_84 = arith.constant 0 : index
    %c0_85 = arith.constant 0 : index
    %66 = vector.load %arg16[%c0_84, %c0_85] : memref<72x648xf32, #tpu.memory_space<vmem>>, vector<8x648xf32>
    tpu.vector_store %arg16[%c0_84, %c0_85], %65 {strides = array<i32>} : memref<72x648xf32, #tpu.memory_space<vmem>>, vector<8x648xf32>,
    %c0_86 = arith.constant 0 : index
    %c1_87 = arith.constant 1 : index
    %67 = vector.load %arg15[%c0_86, %c1_87] : memref<8x686xf32, #tpu.memory_space<vmem>>, vector<8x648xf32>
    %c8_88 = arith.constant 8 : index
    %c0_89 = arith.constant 0 : index
    %68 = vector.load %arg16[%c8_88, %c0_89] : memref<72x648xf32, #tpu.memory_space<vmem>>, vector<8x648xf32>
    tpu.vector_store %arg16[%c8_88, %c0_89], %67 {strides = array<i32>} : memref<72x648xf32, #tpu.memory_space<vmem>>, vector<8x648xf32>,
    %c0_90 = arith.constant 0 : index
    %c2_91 = arith.constant 2 : index
    %69 = vector.load %arg15[%c0_90, %c2_91] : memref<8x686xf32, #tpu.memory_space<vmem>>, vector<8x648xf32>
    %c16_92 = arith.constant 16 : index
    %c0_93 = arith.constant 0 : index
    %70 = vector.load %arg16[%c16_92, %c0_93] : memref<72x648xf32, #tpu.memory_space<vmem>>, vector<8x648xf32>
    tpu.vector_store %arg16[%c16_92, %c0_93], %69 {strides = array<i32>} : memref<72x648xf32, #tpu.memory_space<vmem>>, vector<8x648xf32>,
    %c0_94 = arith.constant 0 : index
    %c18_95 = arith.constant 18 : index
    %71 = vector.load %arg15[%c0_94, %c18_95] : memref<8x686xf32, #tpu.memory_space<vmem>>, vector<8x648xf32>
    %c24_96 = arith.constant 24 : index
    %c0_97 = arith.constant 0 : index
    %72 = vector.load %arg16[%c24_96, %c0_97] : memref<72x648xf32, #tpu.memory_space<vmem>>, vector<8x648xf32>
    tpu.vector_store %arg16[%c24_96, %c0_97], %71 {strides = array<i32>} : memref<72x648xf32, #tpu.memory_space<vmem>>, vector<8x648xf32>,
    %c0_98 = arith.constant 0 : index
    %c19_99 = arith.constant 19 : index
    %73 = vector.load %arg15[%c0_98, %c19_99] : memref<8x686xf32, #tpu.memory_space<vmem>>, vector<8x648xf32>
    %c32_100 = arith.constant 32 : index
    %c0_101 = arith.constant 0 : index
    %74 = vector.load %arg16[%c32_100, %c0_101] : memref<72x648xf32, #tpu.memory_space<vmem>>, vector<8x648xf32>
    tpu.vector_store %arg16[%c32_100, %c0_101], %73 {strides = array<i32>} : memref<72x648xf32, #tpu.memory_space<vmem>>, vector<8x648xf32>,
    %c0_102 = arith.constant 0 : index
    %c20_103 = arith.constant 20 : index
    %75 = vector.load %arg15[%c0_102, %c20_103] : memref<8x686xf32, #tpu.memory_space<vmem>>, vector<8x648xf32>
    %c40_104 = arith.constant 40 : index
    %c0_105 = arith.constant 0 : index
    %76 = vector.load %arg16[%c40_104, %c0_105] : memref<72x648xf32, #tpu.memory_space<vmem>>, vector<8x648xf32>
    tpu.vector_store %arg16[%c40_104, %c0_105], %75 {strides = array<i32>} : memref<72x648xf32, #tpu.memory_space<vmem>>, vector<8x648xf32>,
    %c0_106 = arith.constant 0 : index
    %c36_107 = arith.constant 36 : index
    %77 = vector.load %arg15[%c0_106, %c36_107] : memref<8x686xf32, #tpu.memory_space<vmem>>, vector<8x648xf32>
    %c48_108 = arith.constant 48 : index
    %c0_109 = arith.constant 0 : index
    %78 = vector.load %arg16[%c48_108, %c0_109] : memref<72x648xf32, #tpu.memory_space<vmem>>, vector<8x648xf32>
    tpu.vector_store %arg16[%c48_108, %c0_109], %77 {strides = array<i32>} : memref<72x648xf32, #tpu.memory_space<vmem>>, vector<8x648xf32>,
    %c0_110 = arith.constant 0 : index
    %c37_111 = arith.constant 37 : index
    %79 = vector.load %arg15[%c0_110, %c37_111] : memref<8x686xf32, #tpu.memory_space<vmem>>, vector<8x648xf32>
    %c56_112 = arith.constant 56 : index
    %c0_113 = arith.constant 0 : index
    %80 = vector.load %arg16[%c56_112, %c0_113] : memref<72x648xf32, #tpu.memory_space<vmem>>, vector<8x648xf32>
    tpu.vector_store %arg16[%c56_112, %c0_113], %79 {strides = array<i32>} : memref<72x648xf32, #tpu.memory_space<vmem>>, vector<8x648xf32>,
    %c0_114 = arith.constant 0 : index
    %c38_115 = arith.constant 38 : index
    %81 = vector.load %arg15[%c0_114, %c38_115] : memref<8x686xf32, #tpu.memory_space<vmem>>, vector<8x648xf32>
    %c64_116 = arith.constant 64 : index
    %c0_117 = arith.constant 0 : index
    %82 = vector.load %arg16[%c64_116, %c0_117] : memref<72x648xf32, #tpu.memory_space<vmem>>, vector<8x648xf32>
    tpu.vector_store %arg16[%c64_116, %c0_117], %81 {strides = array<i32>} : memref<72x648xf32, #tpu.memory_space<vmem>>, vector<8x648xf32>,
    %c0_118 = arith.constant 0 : index
    %c0_119 = arith.constant 0 : index
    %83 = vector.load %arg6[%c0_118, %c0_119] : memref<8x72xf32, #tpu.memory_space<vmem>>, vector<8x72xf32>
    %c0_120 = arith.constant 0 : index
    %c0_121 = arith.constant 0 : index
    %84 = vector.load %arg16[%c0_120, %c0_121] : memref<72x648xf32, #tpu.memory_space<vmem>>, vector<72x648xf32>
    %cst_122 = arith.constant dense<0.000000e+00> : vector<8x648xf32>
    %85 = tpu.matmul %83, %84, %cst_122 {dimension_numbers = #tpu.dot_dimension_numbers<[1], [0], [0], [1], [0, 0, 1, 1], [], []>} : vector<8x72xf32>, vector<72x648xf32>, vector<8x648xf32> -> vector<8x648xf32>
    %c0_123 = arith.constant 0 : index
    %c0_124 = arith.constant 0 : index
    %86 = vector.load %arg7[%c0_123, %c0_124] : memref<8x1xf32, #tpu.memory_space<vmem>>, vector<8x1xf32>
    %87 = vector.broadcast %86 : vector<8x1xf32> to vector<8x648xf32>
    %88 = arith.addf %85, %87 : vector<8x648xf32>
    %89 = arith.addf %32, %88 : vector<8x648xf32>
    %cst_125 = arith.constant 0.000000e+00 : f32
    %90 = vector.broadcast %cst_125 : f32 to vector<8x648xf32>
    %91 = arith.maximumf %89, %90 : vector<8x648xf32>
    %cst_126 = arith.constant 0.000000e+00 : f32
    %92 = vector.broadcast %cst_126 : f32 to vector<8x648xf32>
    %93 = arith.select %4, %91, %92 : vector<8x648xi1>, vector<8x648xf32>
    %94 = vector.extract_strided_slice %93 {offsets = [0, 0], sizes = [8, 324], strides = [1, 1]} : vector<8x648xf32> to vector<8x324xf32>
    %cst_127 = arith.constant dense<0.000000e+00> : vector<8xf32>
    %95 = vector.multi_reduction <add>, %94, %cst_127 [1] : vector<8x324xf32> to vector<8xf32>
    %96 = vector.shape_cast %95 : vector<8xf32> to vector<8x1xf32>
    %cst_128 = arith.constant 3.906250e-03 : f32
    %97 = vector.broadcast %cst_128 : f32 to vector<8x1xf32>
    %98 = arith.mulf %96, %97 : vector<8x1xf32>
    %99 = vector.extract_strided_slice %93 {offsets = [0, 324], sizes = [8, 324], strides = [1, 1]} : vector<8x648xf32> to vector<8x324xf32>
    %cst_129 = arith.constant dense<0.000000e+00> : vector<8xf32>
    %100 = vector.multi_reduction <add>, %99, %cst_129 [1] : vector<8x324xf32> to vector<8xf32>
    %101 = vector.shape_cast %100 : vector<8xf32> to vector<8x1xf32>
    %cst_130 = arith.constant 3.906250e-03 : f32
    %102 = vector.broadcast %cst_130 : f32 to vector<8x1xf32>
    %103 = arith.mulf %101, %102 : vector<8x1xf32>
    %104 = tpu.concatenate %98, %103 in 1 : vector<8x1xf32>, vector<8x1xf32> -> vector<8x2xf32>
    %c0_131 = arith.constant 0 : index
    %c0_132 = arith.constant 0 : index
    %105 = vector.load %arg8[%c0_131, %c0_132] : memref<32x8xf32, #tpu.memory_space<vmem>>, vector<32x8xf32>
    %c0_133 = arith.constant 0 : index
    %c0_134 = arith.constant 0 : index
    %106 = vector.load %arg9[%c0_133, %c0_134] : memref<32x1xf32, #tpu.memory_space<vmem>>, vector<32x1xf32>
    %cst_135 = arith.constant dense<0.000000e+00> : vector<32x2xf32>
    %107 = tpu.matmul %105, %104, %cst_135 {dimension_numbers = #tpu.dot_dimension_numbers<[1], [0], [0], [1], [0, 0, 1, 1], [], []>} : vector<32x8xf32>, vector<8x2xf32>, vector<32x2xf32> -> vector<32x2xf32>
    %108 = vector.broadcast %106 : vector<32x1xf32> to vector<32x2xf32>
    %109 = arith.addf %107, %108 : vector<32x2xf32>
    %cst_136 = arith.constant 0.000000e+00 : f32
    %110 = vector.broadcast %cst_136 : f32 to vector<32x2xf32>
    %111 = arith.maximumf %109, %110 : vector<32x2xf32>
    %c0_137 = arith.constant 0 : index
    %c0_138 = arith.constant 0 : index
    %112 = vector.load %arg10[%c0_137, %c0_138] : memref<16x32xf32, #tpu.memory_space<vmem>>, vector<16x32xf32>
    %c0_139 = arith.constant 0 : index
    %c0_140 = arith.constant 0 : index
    %113 = vector.load %arg11[%c0_139, %c0_140] : memref<16x1xf32, #tpu.memory_space<vmem>>, vector<16x1xf32>
    %cst_141 = arith.constant dense<0.000000e+00> : vector<16x2xf32>
    %114 = tpu.matmul %112, %111, %cst_141 {dimension_numbers = #tpu.dot_dimension_numbers<[1], [0], [0], [1], [0, 0, 1, 1], [], []>} : vector<16x32xf32>, vector<32x2xf32>, vector<16x2xf32> -> vector<16x2xf32>
    %115 = vector.broadcast %113 : vector<16x1xf32> to vector<16x2xf32>
    %116 = arith.addf %114, %115 : vector<16x2xf32>
    %cst_142 = arith.constant 0.000000e+00 : f32
    %117 = vector.broadcast %cst_142 : f32 to vector<16x2xf32>
    %118 = arith.maximumf %116, %117 : vector<16x2xf32>
    %c0_143 = arith.constant 0 : index
    %c0_144 = arith.constant 0 : index
    %119 = vector.load %arg12[%c0_143, %c0_144] : memref<4x16xf32, #tpu.memory_space<vmem>>, vector<4x16xf32>
    %c0_145 = arith.constant 0 : index
    %c0_146 = arith.constant 0 : index
    %120 = vector.load %arg13[%c0_145, %c0_146] : memref<4x1xf32, #tpu.memory_space<vmem>>, vector<4x1xf32>
    %cst_147 = arith.constant dense<0.000000e+00> : vector<4x2xf32>
    %121 = tpu.matmul %119, %118, %cst_147 {dimension_numbers = #tpu.dot_dimension_numbers<[1], [0], [0], [1], [0, 0, 1, 1], [], []>} : vector<4x16xf32>, vector<16x2xf32>, vector<4x2xf32> -> vector<4x2xf32>
    %122 = vector.broadcast %120 : vector<4x1xf32> to vector<4x2xf32>
    %123 = arith.addf %121, %122 : vector<4x2xf32>
    %cst_148 = arith.constant 0.000000e+00 : f32
    %124 = vector.broadcast %cst_148 : f32 to vector<4x2xf32>
    %125 = arith.maximumf %123, %124 : vector<4x2xf32>
    %c0_149 = arith.constant 0 : index
    %c0_150 = arith.constant 0 : index
    %126 = vector.load %arg14[%c0_149, %c0_150] : memref<4x2xf32, #tpu.memory_space<vmem>>, vector<4x2xf32>
    tpu.vector_store %arg14[%c0_149, %c0_150], %125 {strides = array<i32>} : memref<4x2xf32, #tpu.memory_space<vmem>>, vector<4x2xf32>,
    return
  }
}

</mosaic_0001>

<llo_original>
// kernel: custom_resnet_forward.1
$region0: #{custom_resnet_forward.1}
  #allocation0 [shape = 'u32[]', space=smem, size = 0x4, offset = 0x4, fixed_abs, tag = 'smem constant byte address 0x4 - core index']
  #allocation1 [shape = 'u32[144,128]{1,0:T(1,128)}', space=vmem, size = 0x12000, scoped, tag = 'internal scratch']
  #allocation2 [shape = 'f32[8,686]{1,0:T(8,128)}', space=vmem, size = 0x6000, scoped, tag = 'scratch operand']
  #allocation3 [shape = 'f32[72,648]{1,0:T(8,128)}', space=vmem, size = 0x36000, scoped, tag = 'scratch operand']
  %s0 = inlined_call_operand.vmem [shape: f32[8,686], index: 0, kind: input, shape index: {}]
  %s1 = inlined_call_operand.vmem [shape: f32[1,648], index: 1, kind: input, shape index: {}]
  %s2 = inlined_call_operand.vmem [shape: f32[8,72], index: 2, kind: input, shape index: {}]
  %s3 = inlined_call_operand.vmem [shape: f32[8,1], index: 3, kind: input, shape index: {}]
  %s4 = inlined_call_operand.vmem [shape: f32[8,72], index: 4, kind: input, shape index: {}]
  %s5 = inlined_call_operand.vmem [shape: f32[8,1], index: 5, kind: input, shape index: {}]
  %s6 = inlined_call_operand.vmem [shape: f32[8,72], index: 6, kind: input, shape index: {}]
  %s7 = inlined_call_operand.vmem [shape: f32[8,1], index: 7, kind: input, shape index: {}]
  %s8 = inlined_call_operand.vmem [shape: f32[32,8], index: 8, kind: input, shape index: {}]
  %s9 = inlined_call_operand.vmem [shape: f32[32,1], index: 9, kind: input, shape index: {}]
  %s10 = inlined_call_operand.vmem [shape: f32[16,32], index: 10, kind: input, shape index: {}]
  %s11 = inlined_call_operand.vmem [shape: f32[16,1], index: 11, kind: input, shape index: {}]
  %s12 = inlined_call_operand.vmem [shape: f32[4,16], index: 12, kind: input, shape index: {}]
  %s13 = inlined_call_operand.vmem [shape: f32[4,1], index: 13, kind: input, shape index: {}]
  %s14 = inlined_call_operand.vmem [shape: f32[4,2], index: 14, kind: output, shape index: {}]
  %s15 = sld [smem:[#allocation0]]
  $region66: #{custom_resnet_forward.1} parent=0
    _
  %s17 = ssub.s32 1, %s15
  %s18 = scalar_select 0, %s17, %s15
  // Predicated region
  $region2: #{custom_resnet_forward.1} parent=0 // pred_check
    _
  $region3: #{custom_resnet_forward.1} parent=0 // pred_check_branch
    %20 = sbr.rel (0) target = $region5
  $region4: #{custom_resnet_forward.1} parent=0 // pred_region
    _
  $region5: #{custom_resnet_forward.1} parent=0 // pred_fallthru
    _
  // Predicated region
  $region6: #{custom_resnet_forward.1} parent=0 // pred_check
    _
  $region7: #{custom_resnet_forward.1} parent=0 // pred_check_branch
    %22 = sbr.rel (0) target = $region9
  $region8: #{custom_resnet_forward.1} parent=0 // pred_region
    _
  $region9: #{custom_resnet_forward.1} parent=0 // pred_fallthru
    _
  // Predicated region
  $region10: #{custom_resnet_forward.1} parent=0 // pred_check
    _
  $region11: #{custom_resnet_forward.1} parent=0 // pred_check_branch
    %24 = sbr.rel (0) target = $region13
  $region12: #{custom_resnet_forward.1} parent=0 // pred_region
    _
  $region13: #{custom_resnet_forward.1} parent=0 // pred_fallthru
    _
  // Predicated region
  $region14: #{custom_resnet_forward.1} parent=0 // pred_check
    _
  $region15: #{custom_resnet_forward.1} parent=0 // pred_check_branch
    %26 = sbr.rel (0) target = $region17
  $region16: #{custom_resnet_forward.1} parent=0 // pred_region
    _
  $region17: #{custom_resnet_forward.1} parent=0 // pred_fallthru
    _
  // Predicated region
  $region18: #{custom_resnet_forward.1} parent=0 // pred_check
    _
  $region19: #{custom_resnet_forward.1} parent=0 // pred_check_branch
    %28 = sbr.rel (0) target = $region21
  $region20: #{custom_resnet_forward.1} parent=0 // pred_region
    _
  $region21: #{custom_resnet_forward.1} parent=0 // pred_fallthru
    _
  // Predicated region
  $region22: #{custom_resnet_forward.1} parent=0 // pred_check
    _
  $region23: #{custom_resnet_forward.1} parent=0 // pred_check_branch
    %30 = sbr.rel (0) target = $region25
  $region24: #{custom_resnet_forward.1} parent=0 // pred_region
    _
  $region25: #{custom_resnet_forward.1} parent=0 // pred_fallthru
    _
  // Predicated region
  $region26: #{custom_resnet_forward.1} parent=0 // pred_check
    _
  $region27: #{custom_resnet_forward.1} parent=0 // pred_check_branch
    %32 = sbr.rel (0) target = $region29
  $region28: #{custom_resnet_forward.1} parent=0 // pred_region
    _
  $region29: #{custom_resnet_forward.1} parent=0 // pred_fallthru
    _
  // Predicated region
  $region30: #{custom_resnet_forward.1} parent=0 // pred_check
    _
  $region31: #{custom_resnet_forward.1} parent=0 // pred_check_branch
    %34 = sbr.rel (0) target = $region33
  $region32: #{custom_resnet_forward.1} parent=0 // pred_region
    _
  $region33: #{custom_resnet_forward.1} parent=0 // pred_fallthru
    _
  // Predicated region
  $region34: #{custom_resnet_forward.1} parent=0 // pred_check
    _
  $region35: #{custom_resnet_forward.1} parent=0 // pred_check_branch
    %36 = sbr.rel (0) target = $region37
  $region36: #{custom_resnet_forward.1} parent=0 // pred_region
    _
  $region37: #{custom_resnet_forward.1} parent=0 // pred_fallthru
    _
  // Predicated region
  $region38: #{custom_resnet_forward.1} parent=0 // pred_check
    _
  $region39: #{custom_resnet_forward.1} parent=0 // pred_check_branch
    %38 = sbr.rel (0) target = $region41
  $region40: #{custom_resnet_forward.1} parent=0 // pred_region
    _
  $region41: #{custom_resnet_forward.1} parent=0 // pred_fallthru
    _
  // Predicated region
  $region42: #{custom_resnet_forward.1} parent=0 // pred_check
    _
  $region43: #{custom_resnet_forward.1} parent=0 // pred_check_branch
    %40 = sbr.rel (0) target = $region45
  $region44: #{custom_resnet_forward.1} parent=0 // pred_region
    _
  $region45: #{custom_resnet_forward.1} parent=0 // pred_fallthru
    _
  // Predicated region
  $region46: #{custom_resnet_forward.1} parent=0 // pred_check
    _
  $region47: #{custom_resnet_forward.1} parent=0 // pred_check_branch
    %42 = sbr.rel (0) target = $region49
  $region48: #{custom_resnet_forward.1} parent=0 // pred_region
    _
  $region49: #{custom_resnet_forward.1} parent=0 // pred_fallthru
    _
  // Predicated region
  $region50: #{custom_resnet_forward.1} parent=0 // pred_check
    _
  $region51: #{custom_resnet_forward.1} parent=0 // pred_check_branch
    %44 = sbr.rel (0) target = $region53
  $region52: #{custom_resnet_forward.1} parent=0 // pred_region
    _
  $region53: #{custom_resnet_forward.1} parent=0 // pred_fallthru
    _
  // Predicated region
  $region54: #{custom_resnet_forward.1} parent=0 // pred_check
    _
  $region55: #{custom_resnet_forward.1} parent=0 // pred_check_branch
    %46 = sbr.rel (0) target = $region57
  $region56: #{custom_resnet_forward.1} parent=0 // pred_region
    _
  $region57: #{custom_resnet_forward.1} parent=0 // pred_fallthru
    _
  %v47 = vld [vmem:[%s1] sm:$0x3f]
  %vm48 = vcmp.gt.f32.partialorder %v47, 0.0
  %v49 = vsel %vm48, 1, 0
  %v50 = vlaneseq
  %v51 = vshrl.u32 %v50, 7
  %v52 = vsub.s32 0, %v51
  %v53 = vrot.slane %v49, %v52
  %v54 = vlaneseq
  %v55 = vshrl.u32 %v54, 7
  %v56 = vsub.s32 1, %v55
  %v57 = vrot.slane %v49, %v56
  %v58 = vlaneseq
  %v59 = vshrl.u32 %v58, 7
  %v60 = vsub.s32 2, %v59
  %v61 = vrot.slane %v49, %v60
  %v62 = vlaneseq
  %v63 = vshrl.u32 %v62, 7
  %v64 = vsub.s32 3, %v63
  %v65 = vrot.slane %v49, %v64
  %v66 = vlaneseq
  %v67 = vshrl.u32 %v66, 7
  %v68 = vsub.s32 4, %v67
  %v69 = vrot.slane %v49, %v68
  %v70 = vlaneseq
  %v71 = vshrl.u32 %v70, 7
  %v72 = vsub.s32 5, %v71
  %v73 = vrot.slane %v49, %v72
  %vm74 = vcmp.eq.s32.totalorder %v53, 1
  %vm75 = vcmp.eq.s32.totalorder %v57, 1
  %vm76 = vcmp.eq.s32.totalorder %v61, 1
  %vm77 = vcmp.eq.s32.totalorder %v65, 1
  %vm78 = vcmp.eq.s32.totalorder %v69, 1
  %vm79 = vcmp.eq.s32.totalorder %v73, 1
  %v80 = vld [vmem:[%s0] sm:$0xff]
  %v81 = vld [vmem:[%s0 + $0x8] sm:$0xff]
  %v82 = vld [vmem:[%s0 + $0x10] sm:$0xff]
  %v83 = vld [vmem:[%s0 + $0x18] sm:$0xff]
  %v84 = vld [vmem:[%s0 + $0x20] sm:$0xff]
  %v85 = vld [vmem:[%s0 + $0x28] sm:$0xff]
  %86 = vst [vmem:[#allocation3] sm:$0xff] %v80
  %87 = vst [vmem:[#allocation3 + $0x8] sm:$0xff] %v81
  %88 = vst [vmem:[#allocation3 + $0x10] sm:$0xff] %v82
  %89 = vst [vmem:[#allocation3 + $0x18] sm:$0xff] %v83
  %90 = vst [vmem:[#allocation3 + $0x20] sm:$0xff] %v84
  %vm91 = vcmask 64512
  %92 = vst.msk [vmem:[#allocation3 + $0x28] sm:$0xff] %vm91, %v85
  %v93 = vld [vmem:[%s0] sm:$0xff]
  %v94 = vld [vmem:[%s0 + $0x8] sm:$0xff]
  %v95 = vld [vmem:[%s0 + $0x10] sm:$0xff]
  %v96 = vld [vmem:[%s0 + $0x18] sm:$0xff]
  %v97 = vld [vmem:[%s0 + $0x20] sm:$0xff]
  %v98 = vld [vmem:[%s0 + $0x28] sm:$0xff]
  %105 = vrot.lane.b32.xlu0 %v93, 127
  %v106 = vpop.permute.xlu0 %105
  %107 = vrot.lane.b32.xlu0 %v94, 127
  %v108 = vpop.permute.xlu0 %107
  %109 = vrot.lane.b32.xlu0 %v95, 127
  %v110 = vpop.permute.xlu0 %109
  %111 = vrot.lane.b32.xlu0 %v96, 127
  %v112 = vpop.permute.xlu0 %111
  %113 = vrot.lane.b32.xlu0 %v97, 127
  %v114 = vpop.permute.xlu0 %113
  %115 = vrot.lane.b32.xlu0 %v98, 127
  %v116 = vpop.permute.xlu0 %115
  %vm117 = vcmask 1039360
  %v118 = vsel %vm117, %v106, %v108
  %v119 = vsel %vm117, %v108, %v110
  %v120 = vsel %vm117, %v110, %v112
  %v121 = vsel %vm117, %v112, %v114
  %v122 = vsel %vm117, %v114, %v116
  %129 = vst [vmem:[#allocation3 + $0x30] sm:$0xff] %v118
  %130 = vst [vmem:[#allocation3 + $0x38] sm:$0xff] %v119
  %131 = vst [vmem:[#allocation3 + $0x40] sm:$0xff] %v120
  %132 = vst [vmem:[#allocation3 + $0x48] sm:$0xff] %v121
  %133 = vst [vmem:[#allocation3 + $0x50] sm:$0xff] %v122
  %134 = vst.msk [vmem:[#allocation3 + $0x58] sm:$0xff] %vm91, %v116
  %v135 = vld [vmem:[%s0] sm:$0xff]
  %v136 = vld [vmem:[%s0 + $0x8] sm:$0xff]
  %v137 = vld [vmem:[%s0 + $0x10] sm:$0xff]
  %v138 = vld [vmem:[%s0 + $0x18] sm:$0xff]
  %v139 = vld [vmem:[%s0 + $0x20] sm:$0xff]
  %v140 = vld [vmem:[%s0 + $0x28] sm:$0xff]
  %147 = vrot.lane.b32.xlu0 %v135, 126
  %v148 = vpop.permute.xlu0 %147
  %149 = vrot.lane.b32.xlu0 %v136, 126
  %v150 = vpop.permute.xlu0 %149
  %151 = vrot.lane.b32.xlu0 %v137, 126
  %v152 = vpop.permute.xlu0 %151
  %153 = vrot.lane.b32.xlu0 %v138, 126
  %v154 = vpop.permute.xlu0 %153
  %155 = vrot.lane.b32.xlu0 %v139, 126
  %v156 = vpop.permute.xlu0 %155
  %157 = vrot.lane.b32.xlu0 %v140, 126
  %v158 = vpop.permute.xlu0 %157
  %vm159 = vcmask 1031168
  %v160 = vsel %vm159, %v148, %v150
  %v161 = vsel %vm159, %v150, %v152
  %v162 = vsel %vm159, %v152, %v154
  %v163 = vsel %vm159, %v154, %v156
  %v164 = vsel %vm159, %v156, %v158
  %171 = vst [vmem:[#allocation3 + $0x60] sm:$0xff] %v160
  %172 = vst [vmem:[#allocation3 + $0x68] sm:$0xff] %v161
  %173 = vst [vmem:[#allocation3 + $0x70] sm:$0xff] %v162
  %174 = vst [vmem:[#allocation3 + $0x78] sm:$0xff] %v163
  %175 = vst [vmem:[#allocation3 + $0x80] sm:$0xff] %v164
  %176 = vst.msk [vmem:[#allocation3 + $0x88] sm:$0xff] %vm91, %v158
  %v177 = vld [vmem:[%s0] sm:$0xff]
  %v178 = vld [vmem:[%s0 + $0x8] sm:$0xff]
  %v179 = vld [vmem:[%s0 + $0x10] sm:$0xff]
  %v180 = vld [vmem:[%s0 + $0x18] sm:$0xff]
  %v181 = vld [vmem:[%s0 + $0x20] sm:$0xff]
  %v182 = vld [vmem:[%s0 + $0x28] sm:$0xff]
  %189 = vrot.lane.b32.xlu0 %v177, 110
  %v190 = vpop.permute.xlu0 %189
  %191 = vrot.lane.b32.xlu0 %v178, 110
  %v192 = vpop.permute.xlu0 %191
  %193 = vrot.lane.b32.xlu0 %v179, 110
  %v194 = vpop.permute.xlu0 %193
  %195 = vrot.lane.b32.xlu0 %v180, 110
  %v196 = vpop.permute.xlu0 %195
  %197 = vrot.lane.b32.xlu0 %v181, 110
  %v198 = vpop.permute.xlu0 %197
  %199 = vrot.lane.b32.xlu0 %v182, 110
  %v200 = vpop.permute.xlu0 %199
  %vm201 = vcmask 900096
  %v202 = vsel %vm201, %v190, %v192
  %v203 = vsel %vm201, %v192, %v194
  %v204 = vsel %vm201, %v194, %v196
  %v205 = vsel %vm201, %v196, %v198
  %v206 = vsel %vm201, %v198, %v200
  %213 = vst [vmem:[#allocation3 + $0x90] sm:$0xff] %v202
  %214 = vst [vmem:[#allocation3 + $0x98] sm:$0xff] %v203
  %215 = vst [vmem:[#allocation3 + $0xa0] sm:$0xff] %v204
  %216 = vst [vmem:[#allocation3 + $0xa8] sm:$0xff] %v205
  %217 = vst [vmem:[#allocation3 + $0xb0] sm:$0xff] %v206
  %218 = vst.msk [vmem:[#allocation3 + $0xb8] sm:$0xff] %vm91, %v200
  %v219 = vld [vmem:[%s0] sm:$0xff]
  %v220 = vld [vmem:[%s0 + $0x8] sm:$0xff]
  %v221 = vld [vmem:[%s0 + $0x10] sm:$0xff]
  %v222 = vld [vmem:[%s0 + $0x18] sm:$0xff]
  %v223 = vld [vmem:[%s0 + $0x20] sm:$0xff]
  %v224 = vld [vmem:[%s0 + $0x28] sm:$0xff]
  %231 = vrot.lane.b32.xlu0 %v219, 109
  %v232 = vpop.permute.xlu0 %231
  %233 = vrot.lane.b32.xlu0 %v220, 109
  %v234 = vpop.permute.xlu0 %233
  %235 = vrot.lane.b32.xlu0 %v221, 109
  %v236 = vpop.permute.xlu0 %235
  %237 = vrot.lane.b32.xlu0 %v222, 109
  %v238 = vpop.permute.xlu0 %237
  %239 = vrot.lane.b32.xlu0 %v223, 109
  %v240 = vpop.permute.xlu0 %239
  %241 = vrot.lane.b32.xlu0 %v224, 109
  %v242 = vpop.permute.xlu0 %241
  %vm243 = vcmask 891904
  %v244 = vsel %vm243, %v232, %v234
  %v245 = vsel %vm243, %v234, %v236
  %v246 = vsel %vm243, %v236, %v238
  %v247 = vsel %vm243, %v238, %v240
  %v248 = vsel %vm243, %v240, %v242
  %255 = vst [vmem:[#allocation3 + $0xc0] sm:$0xff] %v244
  %256 = vst [vmem:[#allocation3 + $0xc8] sm:$0xff] %v245
  %257 = vst [vmem:[#allocation3 + $0xd0] sm:$0xff] %v246
  %258 = vst [vmem:[#allocation3 + $0xd8] sm:$0xff] %v247
  %259 = vst [vmem:[#allocation3 + $0xe0] sm:$0xff] %v248
  %260 = vst.msk [vmem:[#allocation3 + $0xe8] sm:$0xff] %vm91, %v242
  %v261 = vld [vmem:[%s0] sm:$0xff]
  %v262 = vld [vmem:[%s0 + $0x8] sm:$0xff]
  %v263 = vld [vmem:[%s0 + $0x10] sm:$0xff]
  %v264 = vld [vmem:[%s0 + $0x18] sm:$0xff]
  %v265 = vld [vmem:[%s0 + $0x20] sm:$0xff]
  %v266 = vld [vmem:[%s0 + $0x28] sm:$0xff]
  %273 = vrot.lane.b32.xlu0 %v261, 108
  %v274 = vpop.permute.xlu0 %273
  %275 = vrot.lane.b32.xlu0 %v262, 108
  %v276 = vpop.permute.xlu0 %275
  %277 = vrot.lane.b32.xlu0 %v263, 108
  %v278 = vpop.permute.xlu0 %277
  %279 = vrot.lane.b32.xlu0 %v264, 108
  %v280 = vpop.permute.xlu0 %279
  %281 = vrot.lane.b32.xlu0 %v265, 108
  %v282 = vpop.permute.xlu0 %281
  %283 = vrot.lane.b32.xlu0 %v266, 108
  %v284 = vpop.permute.xlu0 %283
  %vm285 = vcmask 883712
  %v286 = vsel %vm285, %v274, %v276
  %v287 = vsel %vm285, %v276, %v278
  %v288 = vsel %vm285, %v278, %v280
  %v289 = vsel %vm285, %v280, %v282
  %v290 = vsel %vm285, %v282, %v284
  %297 = vst [vmem:[#allocation3 + $0xf0] sm:$0xff] %v286
  %298 = vst [vmem:[#allocation3 + $0xf8] sm:$0xff] %v287
  %299 = vst [vmem:[#allocation3 + $0x100] sm:$0xff] %v288
  %300 = vst [vmem:[#allocation3 + $0x108] sm:$0xff] %v289
  %301 = vst [vmem:[#allocation3 + $0x110] sm:$0xff] %v290
  %302 = vst.msk [vmem:[#allocation3 + $0x118] sm:$0xff] %vm91, %v284
  %v303 = vld [vmem:[%s0] sm:$0xff]
  %v304 = vld [vmem:[%s0 + $0x8] sm:$0xff]
  %v305 = vld [vmem:[%s0 + $0x10] sm:$0xff]
  %v306 = vld [vmem:[%s0 + $0x18] sm:$0xff]
  %v307 = vld [vmem:[%s0 + $0x20] sm:$0xff]
  %v308 = vld [vmem:[%s0 + $0x28] sm:$0xff]
  %315 = vrot.lane.b32.xlu0 %v303, 92
  %v316 = vpop.permute.xlu0 %315
  %317 = vrot.lane.b32.xlu0 %v304, 92
  %v318 = vpop.permute.xlu0 %317
  %319 = vrot.lane.b32.xlu0 %v305, 92
  %v320 = vpop.permute.xlu0 %319
  %321 = vrot.lane.b32.xlu0 %v306, 92
  %v322 = vpop.permute.xlu0 %321
  %323 = vrot.lane.b32.xlu0 %v307, 92
  %v324 = vpop.permute.xlu0 %323
  %325 = vrot.lane.b32.xlu0 %v308, 92
  %v326 = vpop.permute.xlu0 %325
  %vm327 = vcmask 752640
  %v328 = vsel %vm327, %v316, %v318
  %v329 = vsel %vm327, %v318, %v320
  %v330 = vsel %vm327, %v320, %v322
  %v331 = vsel %vm327, %v322, %v324
  %v332 = vsel %vm327, %v324, %v326
  %339 = vst [vmem:[#allocation3 + $0x120] sm:$0xff] %v328
  %340 = vst [vmem:[#allocation3 + $0x128] sm:$0xff] %v329
  %341 = vst [vmem:[#allocation3 + $0x130] sm:$0xff] %v330
  %342 = vst [vmem:[#allocation3 + $0x138] sm:$0xff] %v331
  %343 = vst [vmem:[#allocation3 + $0x140] sm:$0xff] %v332
  %344 = vst.msk [vmem:[#allocation3 + $0x148] sm:$0xff] %vm91, %v326
  %v345 = vld [vmem:[%s0] sm:$0xff]
  %v346 = vld [vmem:[%s0 + $0x8] sm:$0xff]
  %v347 = vld [vmem:[%s0 + $0x10] sm:$0xff]
  %v348 = vld [vmem:[%s0 + $0x18] sm:$0xff]
  %v349 = vld [vmem:[%s0 + $0x20] sm:$0xff]
  %v350 = vld [vmem:[%s0 + $0x28] sm:$0xff]
  %357 = vrot.lane.b32.xlu0 %v345, 91
  %v358 = vpop.permute.xlu0 %357
  %359 = vrot.lane.b32.xlu0 %v346, 91
  %v360 = vpop.permute.xlu0 %359
  %361 = vrot.lane.b32.xlu0 %v347, 91
  %v362 = vpop.permute.xlu0 %361
  %363 = vrot.lane.b32.xlu0 %v348, 91
  %v364 = vpop.permute.xlu0 %363
  %365 = vrot.lane.b32.xlu0 %v349, 91
  %v366 = vpop.permute.xlu0 %365
  %367 = vrot.lane.b32.xlu0 %v350, 91
  %v368 = vpop.permute.xlu0 %367
  %vm369 = vcmask 744448
  %v370 = vsel %vm369, %v358, %v360
  %v371 = vsel %vm369, %v360, %v362
  %v372 = vsel %vm369, %v362, %v364
  %v373 = vsel %vm369, %v364, %v366
  %v374 = vsel %vm369, %v366, %v368
  %381 = vst [vmem:[#allocation3 + $0x150] sm:$0xff] %v370
  %382 = vst [vmem:[#allocation3 + $0x158] sm:$0xff] %v371
  %383 = vst [vmem:[#allocation3 + $0x160] sm:$0xff] %v372
  %384 = vst [vmem:[#allocation3 + $0x168] sm:$0xff] %v373
  %385 = vst [vmem:[#allocation3 + $0x170] sm:$0xff] %v374
  %386 = vst.msk [vmem:[#allocation3 + $0x178] sm:$0xff] %vm91, %v368
  %v387 = vld [vmem:[%s0] sm:$0xff]
  %v388 = vld [vmem:[%s0 + $0x8] sm:$0xff]
  %v389 = vld [vmem:[%s0 + $0x10] sm:$0xff]
  %v390 = vld [vmem:[%s0 + $0x18] sm:$0xff]
  %v391 = vld [vmem:[%s0 + $0x20] sm:$0xff]
  %v392 = vld [vmem:[%s0 + $0x28] sm:$0xff]
  %399 = vrot.lane.b32.xlu0 %v387, 90
  %v400 = vpop.permute.xlu0 %399
  %401 = vrot.lane.b32.xlu0 %v388, 90
  %v402 = vpop.permute.xlu0 %401
  %403 = vrot.lane.b32.xlu0 %v389, 90
  %v404 = vpop.permute.xlu0 %403
  %405 = vrot.lane.b32.xlu0 %v390, 90
  %v406 = vpop.permute.xlu0 %405
  %407 = vrot.lane.b32.xlu0 %v391, 90
  %v408 = vpop.permute.xlu0 %407
  %409 = vrot.lane.b32.xlu0 %v392, 90
  %v410 = vpop.permute.xlu0 %409
  %vm411 = vcmask 736256
  %v412 = vsel %vm411, %v400, %v402
  %v413 = vsel %vm411, %v402, %v404
  %v414 = vsel %vm411, %v404, %v406
  %v415 = vsel %vm411, %v406, %v408
  %v416 = vsel %vm411, %v408, %v410
  %423 = vst [vmem:[#allocation3 + $0x180] sm:$0xff] %v412
  %424 = vst [vmem:[#allocation3 + $0x188] sm:$0xff] %v413
  %425 = vst [vmem:[#allocation3 + $0x190] sm:$0xff] %v414
  %426 = vst [vmem:[#allocation3 + $0x198] sm:$0xff] %v415
  %427 = vst [vmem:[#allocation3 + $0x1a0] sm:$0xff] %v416
  %428 = vst.msk [vmem:[#allocation3 + $0x1a8] sm:$0xff] %vm91, %v410
  %v429 = vld [vmem:[%s2] sm:$0xff]
  %v430 = vld [vmem:[#allocation3] sm:$0xff]
  %v431 = vld [vmem:[#allocation3 + $0x8] sm:$0xff]
  %v432 = vld [vmem:[#allocation3 + $0x10] sm:$0xff]
  %v433 = vld [vmem:[#allocation3 + $0x18] sm:$0xff]
  %v434 = vld [vmem:[#allocation3 + $0x20] sm:$0xff]
  %v435 = vld [vmem:[#allocation3 + $0x28] sm:$0xff]
  %v436 = vld [vmem:[#allocation3 + $0x30] sm:$0xff]
  %v437 = vld [vmem:[#allocation3 + $0x38] sm:$0xff]
  %v438 = vld [vmem:[#allocation3 + $0x40] sm:$0xff]
  %v439 = vld [vmem:[#allocation3 + $0x48] sm:$0xff]
  %v440 = vld [vmem:[#allocation3 + $0x50] sm:$0xff]
  %v441 = vld [vmem:[#allocation3 + $0x58] sm:$0xff]
  %v442 = vld [vmem:[#allocation3 + $0x60] sm:$0xff]
  %v443 = vld [vmem:[#allocation3 + $0x68] sm:$0xff]
  %v444 = vld [vmem:[#allocation3 + $0x70] sm:$0xff]
  %v445 = vld [vmem:[#allocation3 + $0x78] sm:$0xff]
  %v446 = vld [vmem:[#allocation3 + $0x80] sm:$0xff]
  %v447 = vld [vmem:[#allocation3 + $0x88] sm:$0xff]
  %v448 = vld [vmem:[#allocation3 + $0x90] sm:$0xff]
  %v449 = vld [vmem:[#allocation3 + $0x98] sm:$0xff]
  %v450 = vld [vmem:[#allocation3 + $0xa0] sm:$0xff]
  %v451 = vld [vmem:[#allocation3 + $0xa8] sm:$0xff]
  %v452 = vld [vmem:[#allocation3 + $0xb0] sm:$0xff]
  %v453 = vld [vmem:[#allocation3 + $0xb8] sm:$0xff]
  %v454 = vld [vmem:[#allocation3 + $0xc0] sm:$0xff]
  %v455 = vld [vmem:[#allocation3 + $0xc8] sm:$0xff]
  %v456 = vld [vmem:[#allocation3 + $0xd0] sm:$0xff]
  %v457 = vld [vmem:[#allocation3 + $0xd8] sm:$0xff]
  %v458 = vld [vmem:[#allocation3 + $0xe0] sm:$0xff]
  %v459 = vld [vmem:[#allocation3 + $0xe8] sm:$0xff]
  %v460 = vld [vmem:[#allocation3 + $0xf0] sm:$0xff]
  %v461 = vld [vmem:[#allocation3 + $0xf8] sm:$0xff]
  %v462 = vld [vmem:[#allocation3 + $0x100] sm:$0xff]
  %v463 = vld [vmem:[#allocation3 + $0x108] sm:$0xff]
  %v464 = vld [vmem:[#allocation3 + $0x110] sm:$0xff]
  %v465 = vld [vmem:[#allocation3 + $0x118] sm:$0xff]
  %v466 = vld [vmem:[#allocation3 + $0x120] sm:$0xff]
  %v467 = vld [vmem:[#allocation3 + $0x128] sm:$0xff]
  %v468 = vld [vmem:[#allocation3 + $0x130] sm:$0xff]
  %v469 = vld [vmem:[#allocation3 + $0x138] sm:$0xff]
  %v470 = vld [vmem:[#allocation3 + $0x140] sm:$0xff]
  %v471 = vld [vmem:[#allocation3 + $0x148] sm:$0xff]
  %v472 = vld [vmem:[#allocation3 + $0x150] sm:$0xff]
  %v473 = vld [vmem:[#allocation3 + $0x158] sm:$0xff]
  %v474 = vld [vmem:[#allocation3 + $0x160] sm:$0xff]
  %v475 = vld [vmem:[#allocation3 + $0x168] sm:$0xff]
  %v476 = vld [vmem:[#allocation3 + $0x170] sm:$0xff]
  %v477 = vld [vmem:[#allocation3 + $0x178] sm:$0xff]
  %v478 = vld [vmem:[#allocation3 + $0x180] sm:$0xff]
  %v479 = vld [vmem:[#allocation3 + $0x188] sm:$0xff]
  %v480 = vld [vmem:[#allocation3 + $0x190] sm:$0xff]
  %v481 = vld [vmem:[#allocation3 + $0x198] sm:$0xff]
  %v482 = vld [vmem:[#allocation3 + $0x1a0] sm:$0xff]
  %v483 = vld [vmem:[#allocation3 + $0x1a8] sm:$0xff]
  %v484 = vld [vmem:[%s3] sm:$0xff]
  %486 = vset.pattern.permute.xlu0 0
  %487 = vperm.xlu0 %486, %v484
  %v488 = vpop.permute.xlu0 %487
  %vm490 = vcmask 588800
  %v492 = vsel %vm490, %v429, 0
  %494 = vmatprep.subr.mxu0 %v431
  %495 = vmatpush1.msra.mxu0 %v430
  %496 = vmatprep.subr.mxu0 %v437
  %497 = vmatpush1.msra.mxu0 %v436
  %498 = vmatprep.subr.mxu0 %v443
  %499 = vmatpush1.msra.mxu0 %v442
  %500 = vmatprep.subr.mxu0 %v449
  %501 = vmatpush1.msra.mxu0 %v448
  %502 = vmatprep.subr.mxu0 %v455
  %503 = vmatpush1.msra.mxu0 %v454
  %504 = vmatprep.subr.mxu0 %v461
  %505 = vmatpush1.msra.mxu0 %v460
  %506 = vmatprep.subr.mxu0 %v467
  %507 = vmatpush1.msra.mxu0 %v466
  %508 = vmatprep.subr.mxu0 %v473
  %509 = vmatpush1.msra.mxu0 %v472
  %510 = vmatprep.subr.mxu0 %v479
  %511 = vmatpush1.msra.mxu0 %v478
  %512 = vmatprep.subr.mxu0 0.0
  %513 = vmatpush1.msra.mxu0 0.0
  %514 = vmatprep.subr.mxu0 0.0
  %515 = vmatpush1.msra.mxu0 0.0
  %516 = vmatprep.subr.mxu0 0.0
  %517 = vmatpush1.msra.mxu0 0.0
  %518 = vmatprep.subr.mxu0 0.0
  %519 = vmatpush1.msra.mxu0 0.0
  %520 = vmatprep.subr.mxu0 0.0
  %521 = vmatpush1.msra.mxu0 0.0
  %522 = vmatprep.subr.mxu0 0.0
  %523 = vmatpush1.msra.mxu0 0.0
  %524 = vmatprep.subr.mxu0 0.0
  %525 = vmatpush1.msra.mxu0 0.0
  %526 = vmatprep.subr.mxu0 0.0
  %527 = vmatpush1.msra.mxu0 0.0
  %528 = vmatprep.subr.mxu0 0.0
  %529 = vmatpush1.msra.mxu0 0.0
  %530 = vmatprep.subr.mxu0 0.0
  %531 = vmatpush1.msra.mxu0 0.0
  %532 = vmatprep.subr.mxu0 0.0
  %533 = vmatpush1.msra.mxu0 0.0
  %534 = vmatprep.subr.mxu0 0.0
  %535 = vmatpush1.msra.mxu0 0.0
  %536 = vmatprep.subr.mxu0 0.0
  %537 = vmatpush1.msra.mxu0 0.0
  %538 = vmatprep.subr.mxu0 0.0
  %539 = vmatpush1.msra.mxu0 0.0
  %540 = vmatprep.subr.mxu0 0.0
  %541 = vmatpush1.msra.mxu0 0.0
  %542 = vmatprep.subr.mxu0 0.0
  %543 = vmatpush1.msra.mxu0 0.0
  %544 = vmatprep.subr.mxu0 0.0
  %545 = vmatpush1.msra.mxu0 0.0
  %546 = vmatprep.subr.mxu0 0.0
  %547 = vmatpush1.msra.mxu0 0.0
  %548 = vmatprep.subr.mxu0 0.0
  %549 = vmatpush1.msra.mxu0 0.0
  %550 = vmatprep.subr.mxu0 0.0
  %551 = vmatpush1.msra.mxu0 0.0
  %552 = vmatprep.subr.mxu0 0.0
  %553 = vmatpush1.msra.mxu0 0.0
  %554 = vmatprep.subr.mxu0 0.0
  %555 = vmatpush1.msra.mxu0 0.0
  %556 = vmatprep.subr.mxu0 0.0
  %557 = vmatpush1.msra.mxu0 0.0
  %558 = vmatprep.mubr.f32.mxu0 0.0
  %559 = vmatmul.mubr.f32.gmra.mrb[0].mxu0 %v492
  %v560 = vpop.f32.mrb[0].mxu0
  %v561 = vadd.f32 %v488, %v560
  %v562 = vpop.f32.mrb[0].mxu0
  %v563 = vadd.f32 %v488, %v562
  %564 = vdwg.mxu0
  %565 = vmatprep.subr.mxu0 %v433
  %566 = vmatpush1.msra.mxu0 %v432
  %567 = vmatprep.subr.mxu0 %v439
  %568 = vmatpush1.msra.mxu0 %v438
  %569 = vmatprep.subr.mxu0 %v445
  %570 = vmatpush1.msra.mxu0 %v444
  %571 = vmatprep.subr.mxu0 %v451
  %572 = vmatpush1.msra.mxu0 %v450
  %573 = vmatprep.subr.mxu0 %v457
  %574 = vmatpush1.msra.mxu0 %v456
  %575 = vmatprep.subr.mxu0 %v463
  %576 = vmatpush1.msra.mxu0 %v462
  %577 = vmatprep.subr.mxu0 %v469
  %578 = vmatpush1.msra.mxu0 %v468
  %579 = vmatprep.subr.mxu0 %v475
  %580 = vmatpush1.msra.mxu0 %v474
  %581 = vmatprep.subr.mxu0 %v481
  %582 = vmatpush1.msra.mxu0 %v480
  %583 = vmatprep.subr.mxu0 0.0
  %584 = vmatpush1.msra.mxu0 0.0
  %585 = vmatprep.subr.mxu0 0.0
  %586 = vmatpush1.msra.mxu0 0.0
  %587 = vmatprep.subr.mxu0 0.0
  %588 = vmatpush1.msra.mxu0 0.0
  %589 = vmatprep.subr.mxu0 0.0
  %590 = vmatpush1.msra.mxu0 0.0
  %591 = vmatprep.subr.mxu0 0.0
  %592 = vmatpush1.msra.mxu0 0.0
  %593 = vmatprep.subr.mxu0 0.0
  %594 = vmatpush1.msra.mxu0 0.0
  %595 = vmatprep.subr.mxu0 0.0
  %596 = vmatpush1.msra.mxu0 0.0
  %597 = vmatprep.subr.mxu0 0.0
  %598 = vmatpush1.msra.mxu0 0.0
  %599 = vmatprep.subr.mxu0 0.0
  %600 = vmatpush1.msra.mxu0 0.0
  %601 = vmatprep.subr.mxu0 0.0
  %602 = vmatpush1.msra.mxu0 0.0
  %603 = vmatprep.subr.mxu0 0.0
  %604 = vmatpush1.msra.mxu0 0.0
  %605 = vmatprep.subr.mxu0 0.0
  %606 = vmatpush1.msra.mxu0 0.0
  %607 = vmatprep.subr.mxu0 0.0
  %608 = vmatpush1.msra.mxu0 0.0
  %609 = vmatprep.subr.mxu0 0.0
  %610 = vmatpush1.msra.mxu0 0.0
  %611 = vmatprep.subr.mxu0 0.0
  %612 = vmatpush1.msra.mxu0 0.0
  %613 = vmatprep.subr.mxu0 0.0
  %614 = vmatpush1.msra.mxu0 0.0
  %615 = vmatprep.subr.mxu0 0.0
  %616 = vmatpush1.msra.mxu0 0.0
  %617 = vmatprep.subr.mxu0 0.0
  %618 = vmatpush1.msra.mxu0 0.0
  %619 = vmatprep.subr.mxu0 0.0
  %620 = vmatpush1.msra.mxu0 0.0
  %621 = vmatprep.subr.mxu0 0.0
  %622 = vmatpush1.msra.mxu0 0.0
  %623 = vmatprep.subr.mxu0 0.0
  %624 = vmatpush1.msra.mxu0 0.0
  %625 = vmatprep.subr.mxu0 0.0
  %626 = vmatpush1.msra.mxu0 0.0
  %627 = vmatprep.subr.mxu0 0.0
  %628 = vmatpush1.msra.mxu0 0.0
  %629 = vmatprep.mubr.f32.mxu0 0.0
  %630 = vmatmul.mubr.f32.gmra.mrb[0].mxu0 %v492
  %v631 = vpop.f32.mrb[0].mxu0
  %v632 = vadd.f32 %v488, %v631
  %v633 = vpop.f32.mrb[0].mxu0
  %v634 = vadd.f32 %v488, %v633
  %635 = vdwg.mxu0
  %636 = vmatprep.subr.mxu0 %v435
  %637 = vmatpush1.msra.mxu0 %v434
  %638 = vmatprep.subr.mxu0 %v441
  %639 = vmatpush1.msra.mxu0 %v440
  %640 = vmatprep.subr.mxu0 %v447
  %641 = vmatpush1.msra.mxu0 %v446
  %642 = vmatprep.subr.mxu0 %v453
  %643 = vmatpush1.msra.mxu0 %v452
  %644 = vmatprep.subr.mxu0 %v459
  %645 = vmatpush1.msra.mxu0 %v458
  %646 = vmatprep.subr.mxu0 %v465
  %647 = vmatpush1.msra.mxu0 %v464
  %648 = vmatprep.subr.mxu0 %v471
  %649 = vmatpush1.msra.mxu0 %v470
  %650 = vmatprep.subr.mxu0 %v477
  %651 = vmatpush1.msra.mxu0 %v476
  %652 = vmatprep.subr.mxu0 %v483
  %653 = vmatpush1.msra.mxu0 %v482
  %654 = vmatprep.subr.mxu0 0.0
  %655 = vmatpush1.msra.mxu0 0.0
  %656 = vmatprep.subr.mxu0 0.0
  %657 = vmatpush1.msra.mxu0 0.0
  %658 = vmatprep.subr.mxu0 0.0
  %659 = vmatpush1.msra.mxu0 0.0
  %660 = vmatprep.subr.mxu0 0.0
  %661 = vmatpush1.msra.mxu0 0.0
  %662 = vmatprep.subr.mxu0 0.0
  %663 = vmatpush1.msra.mxu0 0.0
  %664 = vmatprep.subr.mxu0 0.0
  %665 = vmatpush1.msra.mxu0 0.0
  %666 = vmatprep.subr.mxu0 0.0
  %667 = vmatpush1.msra.mxu0 0.0
  %668 = vmatprep.subr.mxu0 0.0
  %669 = vmatpush1.msra.mxu0 0.0
  %670 = vmatprep.subr.mxu0 0.0
  %671 = vmatpush1.msra.mxu0 0.0
  %672 = vmatprep.subr.mxu0 0.0
  %673 = vmatpush1.msra.mxu0 0.0
  %674 = vmatprep.subr.mxu0 0.0
  %675 = vmatpush1.msra.mxu0 0.0
  %676 = vmatprep.subr.mxu0 0.0
  %677 = vmatpush1.msra.mxu0 0.0
  %678 = vmatprep.subr.mxu0 0.0
  %679 = vmatpush1.msra.mxu0 0.0
  %680 = vmatprep.subr.mxu0 0.0
  %681 = vmatpush1.msra.mxu0 0.0
  %682 = vmatprep.subr.mxu0 0.0
  %683 = vmatpush1.msra.mxu0 0.0
  %684 = vmatprep.subr.mxu0 0.0
  %685 = vmatpush1.msra.mxu0 0.0
  %686 = vmatprep.subr.mxu0 0.0
  %687 = vmatpush1.msra.mxu0 0.0
  %688 = vmatprep.subr.mxu0 0.0
  %689 = vmatpush1.msra.mxu0 0.0
  %690 = vmatprep.subr.mxu0 0.0
  %691 = vmatpush1.msra.mxu0 0.0
  %692 = vmatprep.subr.mxu0 0.0
  %693 = vmatpush1.msra.mxu0 0.0
  %694 = vmatprep.subr.mxu0 0.0
  %695 = vmatpush1.msra.mxu0 0.0
  %696 = vmatprep.subr.mxu0 0.0
  %697 = vmatpush1.msra.mxu0 0.0
  %698 = vmatprep.subr.mxu0 0.0
  %699 = vmatpush1.msra.mxu0 0.0
  %700 = vmatprep.mubr.f32.mxu0 0.0
  %701 = vmatmul.mubr.f32.gmra.mrb[0].mxu0 %v492
  %v702 = vpop.f32.mrb[0].mxu0
  %v703 = vadd.f32 %v488, %v702
  %v704 = vpop.f32.mrb[0].mxu0
  %v705 = vadd.f32 %v488, %v704
  %706 = vdwg.mxu0
  %v707 = vmax.f32 %v561, 0.0
  %v708 = vmax.f32 %v563, 0.0
  %v709 = vmax.f32 %v632, 0.0
  %v710 = vmax.f32 %v634, 0.0
  %v711 = vmax.f32 %v703, 0.0
  %v712 = vmax.f32 %v705, 0.0
  %v713 = vsel %vm74, %v707, 0.0
  %v714 = vsel %vm75, %v708, 0.0
  %v715 = vsel %vm76, %v709, 0.0
  %v716 = vsel %vm77, %v710, 0.0
  %v717 = vsel %vm78, %v711, 0.0
  %v718 = vsel %vm79, %v712, 0.0
  %719 = vst [vmem:[#allocation2] sm:$0xff] 0.0
  %720 = vst [vmem:[#allocation2 + $0x8] sm:$0xff] 0.0
  %721 = vst [vmem:[#allocation2 + $0x10] sm:$0xff] 0.0
  %722 = vst [vmem:[#allocation2 + $0x18] sm:$0xff] 0.0
  %723 = vst [vmem:[#allocation2 + $0x20] sm:$0xff] 0.0
  %vm724 = vcmask 375808
  %725 = vst.msk [vmem:[#allocation2 + $0x28] sm:$0xff] %vm724, 0.0
  %732 = vrot.lane.b32.xlu0 %v713, 19
  %v733 = vpop.permute.xlu0 %732
  %734 = vrot.lane.b32.xlu0 %v714, 19
  %v735 = vpop.permute.xlu0 %734
  %736 = vrot.lane.b32.xlu0 %v715, 19
  %v737 = vpop.permute.xlu0 %736
  %738 = vrot.lane.b32.xlu0 %v716, 19
  %v739 = vpop.permute.xlu0 %738
  %740 = vrot.lane.b32.xlu0 %v717, 19
  %v741 = vpop.permute.xlu0 %740
  %742 = vrot.lane.b32.xlu0 %v718, 19
  %v743 = vpop.permute.xlu0 %742
  %vm744 = vcmask 154624
  %v745 = vsel %vm744, %v733, %v735
  %v746 = vsel %vm744, %v735, %v737
  %v747 = vsel %vm744, %v737, %v739
  %v748 = vsel %vm744, %v739, %v741
  %v749 = vsel %vm744, %v741, %v743
  %vm756 = vcmask 1047704
  %757 = vst.msk [vmem:[#allocation2] sm:$0xff] %vm756, %v733
  %758 = vst [vmem:[#allocation2 + $0x8] sm:$0xff] %v745
  %759 = vst [vmem:[#allocation2 + $0x10] sm:$0xff] %v746
  %760 = vst [vmem:[#allocation2 + $0x18] sm:$0xff] %v747
  %761 = vst [vmem:[#allocation2 + $0x20] sm:$0xff] %v748
  %vm762 = vcmask 220160
  %763 = vst.msk [vmem:[#allocation2 + $0x28] sm:$0xff] %vm762, %v749
  %v764 = vld [vmem:[#allocation2] sm:$0xff]
  %v765 = vld [vmem:[#allocation2 + $0x8] sm:$0xff]
  %v766 = vld [vmem:[#allocation2 + $0x10] sm:$0xff]
  %v767 = vld [vmem:[#allocation2 + $0x18] sm:$0xff]
  %v768 = vld [vmem:[#allocation2 + $0x20] sm:$0xff]
  %v769 = vld [vmem:[#allocation2 + $0x28] sm:$0xff]
  %770 = vst [vmem:[#allocation3] sm:$0xff] %v764
  %771 = vst [vmem:[#allocation3 + $0x8] sm:$0xff] %v765
  %772 = vst [vmem:[#allocation3 + $0x10] sm:$0xff] %v766
  %773 = vst [vmem:[#allocation3 + $0x18] sm:$0xff] %v767
  %774 = vst [vmem:[#allocation3 + $0x20] sm:$0xff] %v768
  %775 = vst.msk [vmem:[#allocation3 + $0x28] sm:$0xff] %vm91, %v769
  %v776 = vld [vmem:[#allocation2] sm:$0xff]
  %v777 = vld [vmem:[#allocation2 + $0x8] sm:$0xff]
  %v778 = vld [vmem:[#allocation2 + $0x10] sm:$0xff]
  %v779 = vld [vmem:[#allocation2 + $0x18] sm:$0xff]
  %v780 = vld [vmem:[#allocation2 + $0x20] sm:$0xff]
  %v781 = vld [vmem:[#allocation2 + $0x28] sm:$0xff]
  %788 = vrot.lane.b32.xlu0 %v776, 127
  %v789 = vpop.permute.xlu0 %788
  %790 = vrot.lane.b32.xlu0 %v777, 127
  %v791 = vpop.permute.xlu0 %790
  %792 = vrot.lane.b32.xlu0 %v778, 127
  %v793 = vpop.permute.xlu0 %792
  %794 = vrot.lane.b32.xlu0 %v779, 127
  %v795 = vpop.permute.xlu0 %794
  %796 = vrot.lane.b32.xlu0 %v780, 127
  %v797 = vpop.permute.xlu0 %796
  %798 = vrot.lane.b32.xlu0 %v781, 127
  %v799 = vpop.permute.xlu0 %798
  %v800 = vsel %vm117, %v789, %v791
  %v801 = vsel %vm117, %v791, %v793
  %v802 = vsel %vm117, %v793, %v795
  %v803 = vsel %vm117, %v795, %v797
  %v804 = vsel %vm117, %v797, %v799
  %811 = vst [vmem:[#allocation3 + $0x30] sm:$0xff] %v800
  %812 = vst [vmem:[#allocation3 + $0x38] sm:$0xff] %v801
  %813 = vst [vmem:[#allocation3 + $0x40] sm:$0xff] %v802
  %814 = vst [vmem:[#allocation3 + $0x48] sm:$0xff] %v803
  %815 = vst [vmem:[#allocation3 + $0x50] sm:$0xff] %v804
  %816 = vst.msk [vmem:[#allocation3 + $0x58] sm:$0xff] %vm91, %v799
  %v817 = vld [vmem:[#allocation2] sm:$0xff]
  %v818 = vld [vmem:[#allocation2 + $0x8] sm:$0xff]
  %v819 = vld [vmem:[#allocation2 + $0x10] sm:$0xff]
  %v820 = vld [vmem:[#allocation2 + $0x18] sm:$0xff]
  %v821 = vld [vmem:[#allocation2 + $0x20] sm:$0xff]
  %v822 = vld [vmem:[#allocation2 + $0x28] sm:$0xff]
  %829 = vrot.lane.b32.xlu0 %v817, 126
  %v830 = vpop.permute.xlu0 %829
  %831 = vrot.lane.b32.xlu0 %v818, 126
  %v832 = vpop.permute.xlu0 %831
  %833 = vrot.lane.b32.xlu0 %v819, 126
  %v834 = vpop.permute.xlu0 %833
  %835 = vrot.lane.b32.xlu0 %v820, 126
  %v836 = vpop.permute.xlu0 %835
  %837 = vrot.lane.b32.xlu0 %v821, 126
  %v838 = vpop.permute.xlu0 %837
  %839 = vrot.lane.b32.xlu0 %v822, 126
  %v840 = vpop.permute.xlu0 %839
  %v841 = vsel %vm159, %v830, %v832
  %v842 = vsel %vm159, %v832, %v834
  %v843 = vsel %vm159, %v834, %v836
  %v844 = vsel %vm159, %v836, %v838
  %v845 = vsel %vm159, %v838, %v840
  %852 = vst [vmem:[#allocation3 + $0x60] sm:$0xff] %v841
  %853 = vst [vmem:[#allocation3 + $0x68] sm:$0xff] %v842
  %854 = vst [vmem:[#allocation3 + $0x70] sm:$0xff] %v843
  %855 = vst [vmem:[#allocation3 + $0x78] sm:$0xff] %v844
  %856 = vst [vmem:[#allocation3 + $0x80] sm:$0xff] %v845
  %857 = vst.msk [vmem:[#allocation3 + $0x88] sm:$0xff] %vm91, %v840
  %v858 = vld [vmem:[#allocation2] sm:$0xff]
  %v859 = vld [vmem:[#allocation2 + $0x8] sm:$0xff]
  %v860 = vld [vmem:[#allocation2 + $0x10] sm:$0xff]
  %v861 = vld [vmem:[#allocation2 + $0x18] sm:$0xff]
  %v862 = vld [vmem:[#allocation2 + $0x20] sm:$0xff]
  %v863 = vld [vmem:[#allocation2 + $0x28] sm:$0xff]
  %870 = vrot.lane.b32.xlu0 %v858, 110
  %v871 = vpop.permute.xlu0 %870
  %872 = vrot.lane.b32.xlu0 %v859, 110
  %v873 = vpop.permute.xlu0 %872
  %874 = vrot.lane.b32.xlu0 %v860, 110
  %v875 = vpop.permute.xlu0 %874
  %876 = vrot.lane.b32.xlu0 %v861, 110
  %v877 = vpop.permute.xlu0 %876
  %878 = vrot.lane.b32.xlu0 %v862, 110
  %v879 = vpop.permute.xlu0 %878
  %880 = vrot.lane.b32.xlu0 %v863, 110
  %v881 = vpop.permute.xlu0 %880
  %v882 = vsel %vm201, %v871, %v873
  %v883 = vsel %vm201, %v873, %v875
  %v884 = vsel %vm201, %v875, %v877
  %v885 = vsel %vm201, %v877, %v879
  %v886 = vsel %vm201, %v879, %v881
  %893 = vst [vmem:[#allocation3 + $0x90] sm:$0xff] %v882
  %894 = vst [vmem:[#allocation3 + $0x98] sm:$0xff] %v883
  %895 = vst [vmem:[#allocation3 + $0xa0] sm:$0xff] %v884
  %896 = vst [vmem:[#allocation3 + $0xa8] sm:$0xff] %v885
  %897 = vst [vmem:[#allocation3 + $0xb0] sm:$0xff] %v886
  %898 = vst.msk [vmem:[#allocation3 + $0xb8] sm:$0xff] %vm91, %v881
  %v899 = vld [vmem:[#allocation2] sm:$0xff]
  %v900 = vld [vmem:[#allocation2 + $0x8] sm:$0xff]
  %v901 = vld [vmem:[#allocation2 + $0x10] sm:$0xff]
  %v902 = vld [vmem:[#allocation2 + $0x18] sm:$0xff]
  %v903 = vld [vmem:[#allocation2 + $0x20] sm:$0xff]
  %v904 = vld [vmem:[#allocation2 + $0x28] sm:$0xff]
  %911 = vrot.lane.b32.xlu0 %v899, 109
  %v912 = vpop.permute.xlu0 %911
  %913 = vrot.lane.b32.xlu0 %v900, 109
  %v914 = vpop.permute.xlu0 %913
  %915 = vrot.lane.b32.xlu0 %v901, 109
  %v916 = vpop.permute.xlu0 %915
  %917 = vrot.lane.b32.xlu0 %v902, 109
  %v918 = vpop.permute.xlu0 %917
  %919 = vrot.lane.b32.xlu0 %v903, 109
  %v920 = vpop.permute.xlu0 %919
  %921 = vrot.lane.b32.xlu0 %v904, 109
  %v922 = vpop.permute.xlu0 %921
  %v923 = vsel %vm243, %v912, %v914
  %v924 = vsel %vm243, %v914, %v916
  %v925 = vsel %vm243, %v916, %v918
  %v926 = vsel %vm243, %v918, %v920
  %v927 = vsel %vm243, %v920, %v922
  %934 = vst [vmem:[#allocation3 + $0xc0] sm:$0xff] %v923
  %935 = vst [vmem:[#allocation3 + $0xc8] sm:$0xff] %v924
  %936 = vst [vmem:[#allocation3 + $0xd0] sm:$0xff] %v925
  %937 = vst [vmem:[#allocation3 + $0xd8] sm:$0xff] %v926
  %938 = vst [vmem:[#allocation3 + $0xe0] sm:$0xff] %v927
  %939 = vst.msk [vmem:[#allocation3 + $0xe8] sm:$0xff] %vm91, %v922
  %v940 = vld [vmem:[#allocation2] sm:$0xff]
  %v941 = vld [vmem:[#allocation2 + $0x8] sm:$0xff]
  %v942 = vld [vmem:[#allocation2 + $0x10] sm:$0xff]
  %v943 = vld [vmem:[#allocation2 + $0x18] sm:$0xff]
  %v944 = vld [vmem:[#allocation2 + $0x20] sm:$0xff]
  %v945 = vld [vmem:[#allocation2 + $0x28] sm:$0xff]
  %952 = vrot.lane.b32.xlu0 %v940, 108
  %v953 = vpop.permute.xlu0 %952
  %954 = vrot.lane.b32.xlu0 %v941, 108
  %v955 = vpop.permute.xlu0 %954
  %956 = vrot.lane.b32.xlu0 %v942, 108
  %v957 = vpop.permute.xlu0 %956
  %958 = vrot.lane.b32.xlu0 %v943, 108
  %v959 = vpop.permute.xlu0 %958
  %960 = vrot.lane.b32.xlu0 %v944, 108
  %v961 = vpop.permute.xlu0 %960
  %962 = vrot.lane.b32.xlu0 %v945, 108
  %v963 = vpop.permute.xlu0 %962
  %v964 = vsel %vm285, %v953, %v955
  %v965 = vsel %vm285, %v955, %v957
  %v966 = vsel %vm285, %v957, %v959
  %v967 = vsel %vm285, %v959, %v961
  %v968 = vsel %vm285, %v961, %v963
  %975 = vst [vmem:[#allocation3 + $0xf0] sm:$0xff] %v964
  %976 = vst [vmem:[#allocation3 + $0xf8] sm:$0xff] %v965
  %977 = vst [vmem:[#allocation3 + $0x100] sm:$0xff] %v966
  %978 = vst [vmem:[#allocation3 + $0x108] sm:$0xff] %v967
  %979 = vst [vmem:[#allocation3 + $0x110] sm:$0xff] %v968
  %980 = vst.msk [vmem:[#allocation3 + $0x118] sm:$0xff] %vm91, %v963
  %v981 = vld [vmem:[#allocation2] sm:$0xff]
  %v982 = vld [vmem:[#allocation2 + $0x8] sm:$0xff]
  %v983 = vld [vmem:[#allocation2 + $0x10] sm:$0xff]
  %v984 = vld [vmem:[#allocation2 + $0x18] sm:$0xff]
  %v985 = vld [vmem:[#allocation2 + $0x20] sm:$0xff]
  %v986 = vld [vmem:[#allocation2 + $0x28] sm:$0xff]
  %993 = vrot.lane.b32.xlu0 %v981, 92
  %v994 = vpop.permute.xlu0 %993
  %995 = vrot.lane.b32.xlu0 %v982, 92
  %v996 = vpop.permute.xlu0 %995
  %997 = vrot.lane.b32.xlu0 %v983, 92
  %v998 = vpop.permute.xlu0 %997
  %999 = vrot.lane.b32.xlu0 %v984, 92
  %v1000 = vpop.permute.xlu0 %999
  %1001 = vrot.lane.b32.xlu0 %v985, 92
  %v1002 = vpop.permute.xlu0 %1001
  %1003 = vrot.lane.b32.xlu0 %v986, 92
  %v1004 = vpop.permute.xlu0 %1003
  %v1005 = vsel %vm327, %v994, %v996
  %v1006 = vsel %vm327, %v996, %v998
  %v1007 = vsel %vm327, %v998, %v1000
  %v1008 = vsel %vm327, %v1000, %v1002
  %v1009 = vsel %vm327, %v1002, %v1004
  %1016 = vst [vmem:[#allocation3 + $0x120] sm:$0xff] %v1005
  %1017 = vst [vmem:[#allocation3 + $0x128] sm:$0xff] %v1006
  %1018 = vst [vmem:[#allocation3 + $0x130] sm:$0xff] %v1007
  %1019 = vst [vmem:[#allocation3 + $0x138] sm:$0xff] %v1008
  %1020 = vst [vmem:[#allocation3 + $0x140] sm:$0xff] %v1009
  %1021 = vst.msk [vmem:[#allocation3 + $0x148] sm:$0xff] %vm91, %v1004
  %v1022 = vld [vmem:[#allocation2] sm:$0xff]
  %v1023 = vld [vmem:[#allocation2 + $0x8] sm:$0xff]
  %v1024 = vld [vmem:[#allocation2 + $0x10] sm:$0xff]
  %v1025 = vld [vmem:[#allocation2 + $0x18] sm:$0xff]
  %v1026 = vld [vmem:[#allocation2 + $0x20] sm:$0xff]
  %v1027 = vld [vmem:[#allocation2 + $0x28] sm:$0xff]
  %1034 = vrot.lane.b32.xlu0 %v1022, 91
  %v1035 = vpop.permute.xlu0 %1034
  %1036 = vrot.lane.b32.xlu0 %v1023, 91
  %v1037 = vpop.permute.xlu0 %1036
  %1038 = vrot.lane.b32.xlu0 %v1024, 91
  %v1039 = vpop.permute.xlu0 %1038
  %1040 = vrot.lane.b32.xlu0 %v1025, 91
  %v1041 = vpop.permute.xlu0 %1040
  %1042 = vrot.lane.b32.xlu0 %v1026, 91
  %v1043 = vpop.permute.xlu0 %1042
  %1044 = vrot.lane.b32.xlu0 %v1027, 91
  %v1045 = vpop.permute.xlu0 %1044
  %v1046 = vsel %vm369, %v1035, %v1037
  %v1047 = vsel %vm369, %v1037, %v1039
  %v1048 = vsel %vm369, %v1039, %v1041
  %v1049 = vsel %vm369, %v1041, %v1043
  %v1050 = vsel %vm369, %v1043, %v1045
  %1057 = vst [vmem:[#allocation3 + $0x150] sm:$0xff] %v1046
  %1058 = vst [vmem:[#allocation3 + $0x158] sm:$0xff] %v1047
  %1059 = vst [vmem:[#allocation3 + $0x160] sm:$0xff] %v1048
  %1060 = vst [vmem:[#allocation3 + $0x168] sm:$0xff] %v1049
  %1061 = vst [vmem:[#allocation3 + $0x170] sm:$0xff] %v1050
  %1062 = vst.msk [vmem:[#allocation3 + $0x178] sm:$0xff] %vm91, %v1045
  %v1063 = vld [vmem:[#allocation2] sm:$0xff]
  %v1064 = vld [vmem:[#allocation2 + $0x8] sm:$0xff]
  %v1065 = vld [vmem:[#allocation2 + $0x10] sm:$0xff]
  %v1066 = vld [vmem:[#allocation2 + $0x18] sm:$0xff]
  %v1067 = vld [vmem:[#allocation2 + $0x20] sm:$0xff]
  %v1068 = vld [vmem:[#allocation2 + $0x28] sm:$0xff]
  %1075 = vrot.lane.b32.xlu0 %v1063, 90
  %v1076 = vpop.permute.xlu0 %1075
  %1077 = vrot.lane.b32.xlu0 %v1064, 90
  %v1078 = vpop.permute.xlu0 %1077
  %1079 = vrot.lane.b32.xlu0 %v1065, 90
  %v1080 = vpop.permute.xlu0 %1079
  %1081 = vrot.lane.b32.xlu0 %v1066, 90
  %v1082 = vpop.permute.xlu0 %1081
  %1083 = vrot.lane.b32.xlu0 %v1067, 90
  %v1084 = vpop.permute.xlu0 %1083
  %1085 = vrot.lane.b32.xlu0 %v1068, 90
  %v1086 = vpop.permute.xlu0 %1085
  %v1087 = vsel %vm411, %v1076, %v1078
  %v1088 = vsel %vm411, %v1078, %v1080
  %v1089 = vsel %vm411, %v1080, %v1082
  %v1090 = vsel %vm411, %v1082, %v1084
  %v1091 = vsel %vm411, %v1084, %v1086
  %1098 = vst [vmem:[#allocation3 + $0x180] sm:$0xff] %v1087
  %1099 = vst [vmem:[#allocation3 + $0x188] sm:$0xff] %v1088
  %1100 = vst [vmem:[#allocation3 + $0x190] sm:$0xff] %v1089
  %1101 = vst [vmem:[#allocation3 + $0x198] sm:$0xff] %v1090
  %1102 = vst [vmem:[#allocation3 + $0x1a0] sm:$0xff] %v1091
  %1103 = vst.msk [vmem:[#allocation3 + $0x1a8] sm:$0xff] %vm91, %v1086
  %v1104 = vld [vmem:[%s4] sm:$0xff]
  %v1105 = vld [vmem:[#allocation3] sm:$0xff]
  %v1106 = vld [vmem:[#allocation3 + $0x8] sm:$0xff]
  %v1107 = vld [vmem:[#allocation3 + $0x10] sm:$0xff]
  %v1108 = vld [vmem:[#allocation3 + $0x18] sm:$0xff]
  %v1109 = vld [vmem:[#allocation3 + $0x20] sm:$0xff]
  %v1110 = vld [vmem:[#allocation3 + $0x28] sm:$0xff]
  %v1111 = vld [vmem:[#allocation3 + $0x30] sm:$0xff]
  %v1112 = vld [vmem:[#allocation3 + $0x38] sm:$0xff]
  %v1113 = vld [vmem:[#allocation3 + $0x40] sm:$0xff]
  %v1114 = vld [vmem:[#allocation3 + $0x48] sm:$0xff]
  %v1115 = vld [vmem:[#allocation3 + $0x50] sm:$0xff]
  %v1116 = vld [vmem:[#allocation3 + $0x58] sm:$0xff]
  %v1117 = vld [vmem:[#allocation3 + $0x60] sm:$0xff]
  %v1118 = vld [vmem:[#allocation3 + $0x68] sm:$0xff]
  %v1119 = vld [vmem:[#allocation3 + $0x70] sm:$0xff]
  %v1120 = vld [vmem:[#allocation3 + $0x78] sm:$0xff]
  %v1121 = vld [vmem:[#allocation3 + $0x80] sm:$0xff]
  %v1122 = vld [vmem:[#allocation3 + $0x88] sm:$0xff]
  %v1123 = vld [vmem:[#allocation3 + $0x90] sm:$0xff]
  %v1124 = vld [vmem:[#allocation3 + $0x98] sm:$0xff]
  %v1125 = vld [vmem:[#allocation3 + $0xa0] sm:$0xff]
  %v1126 = vld [vmem:[#allocation3 + $0xa8] sm:$0xff]
  %v1127 = vld [vmem:[#allocation3 + $0xb0] sm:$0xff]
  %v1128 = vld [vmem:[#allocation3 + $0xb8] sm:$0xff]
  %v1129 = vld [vmem:[#allocation3 + $0xc0] sm:$0xff]
  %v1130 = vld [vmem:[#allocation3 + $0xc8] sm:$0xff]
  %v1131 = vld [vmem:[#allocation3 + $0xd0] sm:$0xff]
  %v1132 = vld [vmem:[#allocation3 + $0xd8] sm:$0xff]
  %v1133 = vld [vmem:[#allocation3 + $0xe0] sm:$0xff]
  %v1134 = vld [vmem:[#allocation3 + $0xe8] sm:$0xff]
  %v1135 = vld [vmem:[#allocation3 + $0xf0] sm:$0xff]
  %v1136 = vld [vmem:[#allocation3 + $0xf8] sm:$0xff]
  %v1137 = vld [vmem:[#allocation3 + $0x100] sm:$0xff]
  %v1138 = vld [vmem:[#allocation3 + $0x108] sm:$0xff]
  %v1139 = vld [vmem:[#allocation3 + $0x110] sm:$0xff]
  %v1140 = vld [vmem:[#allocation3 + $0x118] sm:$0xff]
  %v1141 = vld [vmem:[#allocation3 + $0x120] sm:$0xff]
  %v1142 = vld [vmem:[#allocation3 + $0x128] sm:$0xff]
  %v1143 = vld [vmem:[#allocation3 + $0x130] sm:$0xff]
  %v1144 = vld [vmem:[#allocation3 + $0x138] sm:$0xff]
  %v1145 = vld [vmem:[#allocation3 + $0x140] sm:$0xff]
  %v1146 = vld [vmem:[#allocation3 + $0x148] sm:$0xff]
  %v1147 = vld [vmem:[#allocation3 + $0x150] sm:$0xff]
  %v1148 = vld [vmem:[#allocation3 + $0x158] sm:$0xff]
  %v1149 = vld [vmem:[#allocation3 + $0x160] sm:$0xff]
  %v1150 = vld [vmem:[#allocation3 + $0x168] sm:$0xff]
  %v1151 = vld [vmem:[#allocation3 + $0x170] sm:$0xff]
  %v1152 = vld [vmem:[#allocation3 + $0x178] sm:$0xff]
  %v1153 = vld [vmem:[#allocation3 + $0x180] sm:$0xff]
  %v1154 = vld [vmem:[#allocation3 + $0x188] sm:$0xff]
  %v1155 = vld [vmem:[#allocation3 + $0x190] sm:$0xff]
  %v1156 = vld [vmem:[#allocation3 + $0x198] sm:$0xff]
  %v1157 = vld [vmem:[#allocation3 + $0x1a0] sm:$0xff]
  %v1158 = vld [vmem:[#allocation3 + $0x1a8] sm:$0xff]
  %v1159 = vld [vmem:[%s5] sm:$0xff]
  %1161 = vset.pattern.permute.xlu0 0
  %1162 = vperm.xlu0 %1161, %v1159
  %v1163 = vpop.permute.xlu0 %1162
  %v1166 = vsel %vm490, %v1104, 0
  %1168 = vmatprep.subr.mxu0 %v1106
  %1169 = vmatpush1.msra.mxu0 %v1105
  %1170 = vmatprep.subr.mxu0 %v1112
  %1171 = vmatpush1.msra.mxu0 %v1111
  %1172 = vmatprep.subr.mxu0 %v1118
  %1173 = vmatpush1.msra.mxu0 %v1117
  %1174 = vmatprep.subr.mxu0 %v1124
  %1175 = vmatpush1.msra.mxu0 %v1123
  %1176 = vmatprep.subr.mxu0 %v1130
  %1177 = vmatpush1.msra.mxu0 %v1129
  %1178 = vmatprep.subr.mxu0 %v1136
  %1179 = vmatpush1.msra.mxu0 %v1135
  %1180 = vmatprep.subr.mxu0 %v1142
  %1181 = vmatpush1.msra.mxu0 %v1141
  %1182 = vmatprep.subr.mxu0 %v1148
  %1183 = vmatpush1.msra.mxu0 %v1147
  %1184 = vmatprep.subr.mxu0 %v1154
  %1185 = vmatpush1.msra.mxu0 %v1153
  %1186 = vmatprep.subr.mxu0 0.0
  %1187 = vmatpush1.msra.mxu0 0.0
  %1188 = vmatprep.subr.mxu0 0.0
  %1189 = vmatpush1.msra.mxu0 0.0
  %1190 = vmatprep.subr.mxu0 0.0
  %1191 = vmatpush1.msra.mxu0 0.0
  %1192 = vmatprep.subr.mxu0 0.0
  %1193 = vmatpush1.msra.mxu0 0.0
  %1194 = vmatprep.subr.mxu0 0.0
  %1195 = vmatpush1.msra.mxu0 0.0
  %1196 = vmatprep.subr.mxu0 0.0
  %1197 = vmatpush1.msra.mxu0 0.0
  %1198 = vmatprep.subr.mxu0 0.0
  %1199 = vmatpush1.msra.mxu0 0.0
  %1200 = vmatprep.subr.mxu0 0.0
  %1201 = vmatpush1.msra.mxu0 0.0
  %1202 = vmatprep.subr.mxu0 0.0
  %1203 = vmatpush1.msra.mxu0 0.0
  %1204 = vmatprep.subr.mxu0 0.0
  %1205 = vmatpush1.msra.mxu0 0.0
  %1206 = vmatprep.subr.mxu0 0.0
  %1207 = vmatpush1.msra.mxu0 0.0
  %1208 = vmatprep.subr.mxu0 0.0
  %1209 = vmatpush1.msra.mxu0 0.0
  %1210 = vmatprep.subr.mxu0 0.0
  %1211 = vmatpush1.msra.mxu0 0.0
  %1212 = vmatprep.subr.mxu0 0.0
  %1213 = vmatpush1.msra.mxu0 0.0
  %1214 = vmatprep.subr.mxu0 0.0
  %1215 = vmatpush1.msra.mxu0 0.0
  %1216 = vmatprep.subr.mxu0 0.0
  %1217 = vmatpush1.msra.mxu0 0.0
  %1218 = vmatprep.subr.mxu0 0.0
  %1219 = vmatpush1.msra.mxu0 0.0
  %1220 = vmatprep.subr.mxu0 0.0
  %1221 = vmatpush1.msra.mxu0 0.0
  %1222 = vmatprep.subr.mxu0 0.0
  %1223 = vmatpush1.msra.mxu0 0.0
  %1224 = vmatprep.subr.mxu0 0.0
  %1225 = vmatpush1.msra.mxu0 0.0
  %1226 = vmatprep.subr.mxu0 0.0
  %1227 = vmatpush1.msra.mxu0 0.0
  %1228 = vmatprep.subr.mxu0 0.0
  %1229 = vmatpush1.msra.mxu0 0.0
  %1230 = vmatprep.subr.mxu0 0.0
  %1231 = vmatpush1.msra.mxu0 0.0
  %1232 = vmatprep.mubr.f32.mxu0 0.0
  %1233 = vmatmul.mubr.f32.gmra.mrb[0].mxu0 %v1166
  %v1234 = vpop.f32.mrb[0].mxu0
  %v1235 = vadd.f32 %v1163, %v1234
  %v1236 = vpop.f32.mrb[0].mxu0
  %v1237 = vadd.f32 %v1163, %v1236
  %1238 = vdwg.mxu0
  %1239 = vmatprep.subr.mxu0 %v1108
  %1240 = vmatpush1.msra.mxu0 %v1107
  %1241 = vmatprep.subr.mxu0 %v1114
  %1242 = vmatpush1.msra.mxu0 %v1113
  %1243 = vmatprep.subr.mxu0 %v1120
  %1244 = vmatpush1.msra.mxu0 %v1119
  %1245 = vmatprep.subr.mxu0 %v1126
  %1246 = vmatpush1.msra.mxu0 %v1125
  %1247 = vmatprep.subr.mxu0 %v1132
  %1248 = vmatpush1.msra.mxu0 %v1131
  %1249 = vmatprep.subr.mxu0 %v1138
  %1250 = vmatpush1.msra.mxu0 %v1137
  %1251 = vmatprep.subr.mxu0 %v1144
  %1252 = vmatpush1.msra.mxu0 %v1143
  %1253 = vmatprep.subr.mxu0 %v1150
  %1254 = vmatpush1.msra.mxu0 %v1149
  %1255 = vmatprep.subr.mxu0 %v1156
  %1256 = vmatpush1.msra.mxu0 %v1155
  %1257 = vmatprep.subr.mxu0 0.0
  %1258 = vmatpush1.msra.mxu0 0.0
  %1259 = vmatprep.subr.mxu0 0.0
  %1260 = vmatpush1.msra.mxu0 0.0
  %1261 = vmatprep.subr.mxu0 0.0
  %1262 = vmatpush1.msra.mxu0 0.0
  %1263 = vmatprep.subr.mxu0 0.0
  %1264 = vmatpush1.msra.mxu0 0.0
  %1265 = vmatprep.subr.mxu0 0.0
  %1266 = vmatpush1.msra.mxu0 0.0
  %1267 = vmatprep.subr.mxu0 0.0
  %1268 = vmatpush1.msra.mxu0 0.0
  %1269 = vmatprep.subr.mxu0 0.0
  %1270 = vmatpush1.msra.mxu0 0.0
  %1271 = vmatprep.subr.mxu0 0.0
  %1272 = vmatpush1.msra.mxu0 0.0
  %1273 = vmatprep.subr.mxu0 0.0
  %1274 = vmatpush1.msra.mxu0 0.0
  %1275 = vmatprep.subr.mxu0 0.0
  %1276 = vmatpush1.msra.mxu0 0.0
  %1277 = vmatprep.subr.mxu0 0.0
  %1278 = vmatpush1.msra.mxu0 0.0
  %1279 = vmatprep.subr.mxu0 0.0
  %1280 = vmatpush1.msra.mxu0 0.0
  %1281 = vmatprep.subr.mxu0 0.0
  %1282 = vmatpush1.msra.mxu0 0.0
  %1283 = vmatprep.subr.mxu0 0.0
  %1284 = vmatpush1.msra.mxu0 0.0
  %1285 = vmatprep.subr.mxu0 0.0
  %1286 = vmatpush1.msra.mxu0 0.0
  %1287 = vmatprep.subr.mxu0 0.0
  %1288 = vmatpush1.msra.mxu0 0.0
  %1289 = vmatprep.subr.mxu0 0.0
  %1290 = vmatpush1.msra.mxu0 0.0
  %1291 = vmatprep.subr.mxu0 0.0
  %1292 = vmatpush1.msra.mxu0 0.0
  %1293 = vmatprep.subr.mxu0 0.0
  %1294 = vmatpush1.msra.mxu0 0.0
  %1295 = vmatprep.subr.mxu0 0.0
  %1296 = vmatpush1.msra.mxu0 0.0
  %1297 = vmatprep.subr.mxu0 0.0
  %1298 = vmatpush1.msra.mxu0 0.0
  %1299 = vmatprep.subr.mxu0 0.0
  %1300 = vmatpush1.msra.mxu0 0.0
  %1301 = vmatprep.subr.mxu0 0.0
  %1302 = vmatpush1.msra.mxu0 0.0
  %1303 = vmatprep.mubr.f32.mxu0 0.0
  %1304 = vmatmul.mubr.f32.gmra.mrb[0].mxu0 %v1166
  %v1305 = vpop.f32.mrb[0].mxu0
  %v1306 = vadd.f32 %v1163, %v1305
  %v1307 = vpop.f32.mrb[0].mxu0
  %v1308 = vadd.f32 %v1163, %v1307
  %1309 = vdwg.mxu0
  %1310 = vmatprep.subr.mxu0 %v1110
  %1311 = vmatpush1.msra.mxu0 %v1109
  %1312 = vmatprep.subr.mxu0 %v1116
  %1313 = vmatpush1.msra.mxu0 %v1115
  %1314 = vmatprep.subr.mxu0 %v1122
  %1315 = vmatpush1.msra.mxu0 %v1121
  %1316 = vmatprep.subr.mxu0 %v1128
  %1317 = vmatpush1.msra.mxu0 %v1127
  %1318 = vmatprep.subr.mxu0 %v1134
  %1319 = vmatpush1.msra.mxu0 %v1133
  %1320 = vmatprep.subr.mxu0 %v1140
  %1321 = vmatpush1.msra.mxu0 %v1139
  %1322 = vmatprep.subr.mxu0 %v1146
  %1323 = vmatpush1.msra.mxu0 %v1145
  %1324 = vmatprep.subr.mxu0 %v1152
  %1325 = vmatpush1.msra.mxu0 %v1151
  %1326 = vmatprep.subr.mxu0 %v1158
  %1327 = vmatpush1.msra.mxu0 %v1157
  %1328 = vmatprep.subr.mxu0 0.0
  %1329 = vmatpush1.msra.mxu0 0.0
  %1330 = vmatprep.subr.mxu0 0.0
  %1331 = vmatpush1.msra.mxu0 0.0
  %1332 = vmatprep.subr.mxu0 0.0
  %1333 = vmatpush1.msra.mxu0 0.0
  %1334 = vmatprep.subr.mxu0 0.0
  %1335 = vmatpush1.msra.mxu0 0.0
  %1336 = vmatprep.subr.mxu0 0.0
  %1337 = vmatpush1.msra.mxu0 0.0
  %1338 = vmatprep.subr.mxu0 0.0
  %1339 = vmatpush1.msra.mxu0 0.0
  %1340 = vmatprep.subr.mxu0 0.0
  %1341 = vmatpush1.msra.mxu0 0.0
  %1342 = vmatprep.subr.mxu0 0.0
  %1343 = vmatpush1.msra.mxu0 0.0
  %1344 = vmatprep.subr.mxu0 0.0
  %1345 = vmatpush1.msra.mxu0 0.0
  %1346 = vmatprep.subr.mxu0 0.0
  %1347 = vmatpush1.msra.mxu0 0.0
  %1348 = vmatprep.subr.mxu0 0.0
  %1349 = vmatpush1.msra.mxu0 0.0
  %1350 = vmatprep.subr.mxu0 0.0
  %1351 = vmatpush1.msra.mxu0 0.0
  %1352 = vmatprep.subr.mxu0 0.0
  %1353 = vmatpush1.msra.mxu0 0.0
  %1354 = vmatprep.subr.mxu0 0.0
  %1355 = vmatpush1.msra.mxu0 0.0
  %1356 = vmatprep.subr.mxu0 0.0
  %1357 = vmatpush1.msra.mxu0 0.0
  %1358 = vmatprep.subr.mxu0 0.0
  %1359 = vmatpush1.msra.mxu0 0.0
  %1360 = vmatprep.subr.mxu0 0.0
  %1361 = vmatpush1.msra.mxu0 0.0
  %1362 = vmatprep.subr.mxu0 0.0
  %1363 = vmatpush1.msra.mxu0 0.0
  %1364 = vmatprep.subr.mxu0 0.0
  %1365 = vmatpush1.msra.mxu0 0.0
  %1366 = vmatprep.subr.mxu0 0.0
  %1367 = vmatpush1.msra.mxu0 0.0
  %1368 = vmatprep.subr.mxu0 0.0
  %1369 = vmatpush1.msra.mxu0 0.0
  %1370 = vmatprep.subr.mxu0 0.0
  %1371 = vmatpush1.msra.mxu0 0.0
  %1372 = vmatprep.subr.mxu0 0.0
  %1373 = vmatpush1.msra.mxu0 0.0
  %1374 = vmatprep.mubr.f32.mxu0 0.0
  %1375 = vmatmul.mubr.f32.gmra.mrb[0].mxu0 %v1166
  %v1376 = vpop.f32.mrb[0].mxu0
  %v1377 = vadd.f32 %v1163, %v1376
  %v1378 = vpop.f32.mrb[0].mxu0
  %v1379 = vadd.f32 %v1163, %v1378
  %1380 = vdwg.mxu0
  %v1381 = vmax.f32 %v1235, 0.0
  %v1382 = vmax.f32 %v1237, 0.0
  %v1383 = vmax.f32 %v1306, 0.0
  %v1384 = vmax.f32 %v1308, 0.0
  %v1385 = vmax.f32 %v1377, 0.0
  %v1386 = vmax.f32 %v1379, 0.0
  %v1387 = vsel %vm74, %v1381, 0.0
  %v1388 = vsel %vm75, %v1382, 0.0
  %v1389 = vsel %vm76, %v1383, 0.0
  %v1390 = vsel %vm77, %v1384, 0.0
  %v1391 = vsel %vm78, %v1385, 0.0
  %v1392 = vsel %vm79, %v1386, 0.0
  %1399 = vrot.lane.b32.xlu0 %v1387, 19
  %v1400 = vpop.permute.xlu0 %1399
  %1401 = vrot.lane.b32.xlu0 %v1388, 19
  %v1402 = vpop.permute.xlu0 %1401
  %1403 = vrot.lane.b32.xlu0 %v1389, 19
  %v1404 = vpop.permute.xlu0 %1403
  %1405 = vrot.lane.b32.xlu0 %v1390, 19
  %v1406 = vpop.permute.xlu0 %1405
  %1407 = vrot.lane.b32.xlu0 %v1391, 19
  %v1408 = vpop.permute.xlu0 %1407
  %1409 = vrot.lane.b32.xlu0 %v1392, 19
  %v1410 = vpop.permute.xlu0 %1409
  %v1411 = vsel %vm744, %v1400, %v1402
  %v1412 = vsel %vm744, %v1402, %v1404
  %v1413 = vsel %vm744, %v1404, %v1406
  %v1414 = vsel %vm744, %v1406, %v1408
  %v1415 = vsel %vm744, %v1408, %v1410
  %1422 = vst.msk [vmem:[#allocation2] sm:$0xff] %vm756, %v1400
  %1423 = vst [vmem:[#allocation2 + $0x8] sm:$0xff] %v1411
  %1424 = vst [vmem:[#allocation2 + $0x10] sm:$0xff] %v1412
  %1425 = vst [vmem:[#allocation2 + $0x18] sm:$0xff] %v1413
  %1426 = vst [vmem:[#allocation2 + $0x20] sm:$0xff] %v1414
  %1427 = vst.msk [vmem:[#allocation2 + $0x28] sm:$0xff] %vm762, %v1415
  %v1428 = vld [vmem:[#allocation2] sm:$0xff]
  %v1429 = vld [vmem:[#allocation2 + $0x8] sm:$0xff]
  %v1430 = vld [vmem:[#allocation2 + $0x10] sm:$0xff]
  %v1431 = vld [vmem:[#allocation2 + $0x18] sm:$0xff]
  %v1432 = vld [vmem:[#allocation2 + $0x20] sm:$0xff]
  %v1433 = vld [vmem:[#allocation2 + $0x28] sm:$0xff]
  %1434 = vst [vmem:[#allocation3] sm:$0xff] %v1428
  %1435 = vst [vmem:[#allocation3 + $0x8] sm:$0xff] %v1429
  %1436 = vst [vmem:[#allocation3 + $0x10] sm:$0xff] %v1430
  %1437 = vst [vmem:[#allocation3 + $0x18] sm:$0xff] %v1431
  %1438 = vst [vmem:[#allocation3 + $0x20] sm:$0xff] %v1432
  %1439 = vst.msk [vmem:[#allocation3 + $0x28] sm:$0xff] %vm91, %v1433
  %v1440 = vld [vmem:[#allocation2] sm:$0xff]
  %v1441 = vld [vmem:[#allocation2 + $0x8] sm:$0xff]
  %v1442 = vld [vmem:[#allocation2 + $0x10] sm:$0xff]
  %v1443 = vld [vmem:[#allocation2 + $0x18] sm:$0xff]
  %v1444 = vld [vmem:[#allocation2 + $0x20] sm:$0xff]
  %v1445 = vld [vmem:[#allocation2 + $0x28] sm:$0xff]
  %1452 = vrot.lane.b32.xlu0 %v1440, 127
  %v1453 = vpop.permute.xlu0 %1452
  %1454 = vrot.lane.b32.xlu0 %v1441, 127
  %v1455 = vpop.permute.xlu0 %1454
  %1456 = vrot.lane.b32.xlu0 %v1442, 127
  %v1457 = vpop.permute.xlu0 %1456
  %1458 = vrot.lane.b32.xlu0 %v1443, 127
  %v1459 = vpop.permute.xlu0 %1458
  %1460 = vrot.lane.b32.xlu0 %v1444, 127
  %v1461 = vpop.permute.xlu0 %1460
  %1462 = vrot.lane.b32.xlu0 %v1445, 127
  %v1463 = vpop.permute.xlu0 %1462
  %v1464 = vsel %vm117, %v1453, %v1455
  %v1465 = vsel %vm117, %v1455, %v1457
  %v1466 = vsel %vm117, %v1457, %v1459
  %v1467 = vsel %vm117, %v1459, %v1461
  %v1468 = vsel %vm117, %v1461, %v1463
  %1475 = vst [vmem:[#allocation3 + $0x30] sm:$0xff] %v1464
  %1476 = vst [vmem:[#allocation3 + $0x38] sm:$0xff] %v1465
  %1477 = vst [vmem:[#allocation3 + $0x40] sm:$0xff] %v1466
  %1478 = vst [vmem:[#allocation3 + $0x48] sm:$0xff] %v1467
  %1479 = vst [vmem:[#allocation3 + $0x50] sm:$0xff] %v1468
  %1480 = vst.msk [vmem:[#allocation3 + $0x58] sm:$0xff] %vm91, %v1463
  %v1481 = vld [vmem:[#allocation2] sm:$0xff]
  %v1482 = vld [vmem:[#allocation2 + $0x8] sm:$0xff]
  %v1483 = vld [vmem:[#allocation2 + $0x10] sm:$0xff]
  %v1484 = vld [vmem:[#allocation2 + $0x18] sm:$0xff]
  %v1485 = vld [vmem:[#allocation2 + $0x20] sm:$0xff]
  %v1486 = vld [vmem:[#allocation2 + $0x28] sm:$0xff]
  %1493 = vrot.lane.b32.xlu0 %v1481, 126
  %v1494 = vpop.permute.xlu0 %1493
  %1495 = vrot.lane.b32.xlu0 %v1482, 126
  %v1496 = vpop.permute.xlu0 %1495
  %1497 = vrot.lane.b32.xlu0 %v1483, 126
  %v1498 = vpop.permute.xlu0 %1497
  %1499 = vrot.lane.b32.xlu0 %v1484, 126
  %v1500 = vpop.permute.xlu0 %1499
  %1501 = vrot.lane.b32.xlu0 %v1485, 126
  %v1502 = vpop.permute.xlu0 %1501
  %1503 = vrot.lane.b32.xlu0 %v1486, 126
  %v1504 = vpop.permute.xlu0 %1503
  %v1505 = vsel %vm159, %v1494, %v1496
  %v1506 = vsel %vm159, %v1496, %v1498
  %v1507 = vsel %vm159, %v1498, %v1500
  %v1508 = vsel %vm159, %v1500, %v1502
  %v1509 = vsel %vm159, %v1502, %v1504
  %1516 = vst [vmem:[#allocation3 + $0x60] sm:$0xff] %v1505
  %1517 = vst [vmem:[#allocation3 + $0x68] sm:$0xff] %v1506
  %1518 = vst [vmem:[#allocation3 + $0x70] sm:$0xff] %v1507
  %1519 = vst [vmem:[#allocation3 + $0x78] sm:$0xff] %v1508
  %1520 = vst [vmem:[#allocation3 + $0x80] sm:$0xff] %v1509
  %1521 = vst.msk [vmem:[#allocation3 + $0x88] sm:$0xff] %vm91, %v1504
  %v1522 = vld [vmem:[#allocation2] sm:$0xff]
  %v1523 = vld [vmem:[#allocation2 + $0x8] sm:$0xff]
  %v1524 = vld [vmem:[#allocation2 + $0x10] sm:$0xff]
  %v1525 = vld [vmem:[#allocation2 + $0x18] sm:$0xff]
  %v1526 = vld [vmem:[#allocation2 + $0x20] sm:$0xff]
  %v1527 = vld [vmem:[#allocation2 + $0x28] sm:$0xff]
  %1534 = vrot.lane.b32.xlu0 %v1522, 110
  %v1535 = vpop.permute.xlu0 %1534
  %1536 = vrot.lane.b32.xlu0 %v1523, 110
  %v1537 = vpop.permute.xlu0 %1536
  %1538 = vrot.lane.b32.xlu0 %v1524, 110
  %v1539 = vpop.permute.xlu0 %1538
  %1540 = vrot.lane.b32.xlu0 %v1525, 110
  %v1541 = vpop.permute.xlu0 %1540
  %1542 = vrot.lane.b32.xlu0 %v1526, 110
  %v1543 = vpop.permute.xlu0 %1542
  %1544 = vrot.lane.b32.xlu0 %v1527, 110
  %v1545 = vpop.permute.xlu0 %1544
  %v1546 = vsel %vm201, %v1535, %v1537
  %v1547 = vsel %vm201, %v1537, %v1539
  %v1548 = vsel %vm201, %v1539, %v1541
  %v1549 = vsel %vm201, %v1541, %v1543
  %v1550 = vsel %vm201, %v1543, %v1545
  %1557 = vst [vmem:[#allocation3 + $0x90] sm:$0xff] %v1546
  %1558 = vst [vmem:[#allocation3 + $0x98] sm:$0xff] %v1547
  %1559 = vst [vmem:[#allocation3 + $0xa0] sm:$0xff] %v1548
  %1560 = vst [vmem:[#allocation3 + $0xa8] sm:$0xff] %v1549
  %1561 = vst [vmem:[#allocation3 + $0xb0] sm:$0xff] %v1550
  %1562 = vst.msk [vmem:[#allocation3 + $0xb8] sm:$0xff] %vm91, %v1545
  %v1563 = vld [vmem:[#allocation2] sm:$0xff]
  %v1564 = vld [vmem:[#allocation2 + $0x8] sm:$0xff]
  %v1565 = vld [vmem:[#allocation2 + $0x10] sm:$0xff]
  %v1566 = vld [vmem:[#allocation2 + $0x18] sm:$0xff]
  %v1567 = vld [vmem:[#allocation2 + $0x20] sm:$0xff]
  %v1568 = vld [vmem:[#allocation2 + $0x28] sm:$0xff]
  %1575 = vrot.lane.b32.xlu0 %v1563, 109
  %v1576 = vpop.permute.xlu0 %1575
  %1577 = vrot.lane.b32.xlu0 %v1564, 109
  %v1578 = vpop.permute.xlu0 %1577
  %1579 = vrot.lane.b32.xlu0 %v1565, 109
  %v1580 = vpop.permute.xlu0 %1579
  %1581 = vrot.lane.b32.xlu0 %v1566, 109
  %v1582 = vpop.permute.xlu0 %1581
  %1583 = vrot.lane.b32.xlu0 %v1567, 109
  %v1584 = vpop.permute.xlu0 %1583
  %1585 = vrot.lane.b32.xlu0 %v1568, 109
  %v1586 = vpop.permute.xlu0 %1585
  %v1587 = vsel %vm243, %v1576, %v1578
  %v1588 = vsel %vm243, %v1578, %v1580
  %v1589 = vsel %vm243, %v1580, %v1582
  %v1590 = vsel %vm243, %v1582, %v1584
  %v1591 = vsel %vm243, %v1584, %v1586
  %1598 = vst [vmem:[#allocation3 + $0xc0] sm:$0xff] %v1587
  %1599 = vst [vmem:[#allocation3 + $0xc8] sm:$0xff] %v1588
  %1600 = vst [vmem:[#allocation3 + $0xd0] sm:$0xff] %v1589
  %1601 = vst [vmem:[#allocation3 + $0xd8] sm:$0xff] %v1590
  %1602 = vst [vmem:[#allocation3 + $0xe0] sm:$0xff] %v1591
  %1603 = vst.msk [vmem:[#allocation3 + $0xe8] sm:$0xff] %vm91, %v1586
  %v1604 = vld [vmem:[#allocation2] sm:$0xff]
  %v1605 = vld [vmem:[#allocation2 + $0x8] sm:$0xff]
  %v1606 = vld [vmem:[#allocation2 + $0x10] sm:$0xff]
  %v1607 = vld [vmem:[#allocation2 + $0x18] sm:$0xff]
  %v1608 = vld [vmem:[#allocation2 + $0x20] sm:$0xff]
  %v1609 = vld [vmem:[#allocation2 + $0x28] sm:$0xff]
  %1616 = vrot.lane.b32.xlu0 %v1604, 108
  %v1617 = vpop.permute.xlu0 %1616
  %1618 = vrot.lane.b32.xlu0 %v1605, 108
  %v1619 = vpop.permute.xlu0 %1618
  %1620 = vrot.lane.b32.xlu0 %v1606, 108
  %v1621 = vpop.permute.xlu0 %1620
  %1622 = vrot.lane.b32.xlu0 %v1607, 108
  %v1623 = vpop.permute.xlu0 %1622
  %1624 = vrot.lane.b32.xlu0 %v1608, 108
  %v1625 = vpop.permute.xlu0 %1624
  %1626 = vrot.lane.b32.xlu0 %v1609, 108
  %v1627 = vpop.permute.xlu0 %1626
  %v1628 = vsel %vm285, %v1617, %v1619
  %v1629 = vsel %vm285, %v1619, %v1621
  %v1630 = vsel %vm285, %v1621, %v1623
  %v1631 = vsel %vm285, %v1623, %v1625
  %v1632 = vsel %vm285, %v1625, %v1627
  %1639 = vst [vmem:[#allocation3 + $0xf0] sm:$0xff] %v1628
  %1640 = vst [vmem:[#allocation3 + $0xf8] sm:$0xff] %v1629
  %1641 = vst [vmem:[#allocation3 + $0x100] sm:$0xff] %v1630
  %1642 = vst [vmem:[#allocation3 + $0x108] sm:$0xff] %v1631
  %1643 = vst [vmem:[#allocation3 + $0x110] sm:$0xff] %v1632
  %1644 = vst.msk [vmem:[#allocation3 + $0x118] sm:$0xff] %vm91, %v1627
  %v1645 = vld [vmem:[#allocation2] sm:$0xff]
  %v1646 = vld [vmem:[#allocation2 + $0x8] sm:$0xff]
  %v1647 = vld [vmem:[#allocation2 + $0x10] sm:$0xff]
  %v1648 = vld [vmem:[#allocation2 + $0x18] sm:$0xff]
  %v1649 = vld [vmem:[#allocation2 + $0x20] sm:$0xff]
  %v1650 = vld [vmem:[#allocation2 + $0x28] sm:$0xff]
  %1657 = vrot.lane.b32.xlu0 %v1645, 92
  %v1658 = vpop.permute.xlu0 %1657
  %1659 = vrot.lane.b32.xlu0 %v1646, 92
  %v1660 = vpop.permute.xlu0 %1659
  %1661 = vrot.lane.b32.xlu0 %v1647, 92
  %v1662 = vpop.permute.xlu0 %1661
  %1663 = vrot.lane.b32.xlu0 %v1648, 92
  %v1664 = vpop.permute.xlu0 %1663
  %1665 = vrot.lane.b32.xlu0 %v1649, 92
  %v1666 = vpop.permute.xlu0 %1665
  %1667 = vrot.lane.b32.xlu0 %v1650, 92
  %v1668 = vpop.permute.xlu0 %1667
  %v1669 = vsel %vm327, %v1658, %v1660
  %v1670 = vsel %vm327, %v1660, %v1662
  %v1671 = vsel %vm327, %v1662, %v1664
  %v1672 = vsel %vm327, %v1664, %v1666
  %v1673 = vsel %vm327, %v1666, %v1668
  %1680 = vst [vmem:[#allocation3 + $0x120] sm:$0xff] %v1669
  %1681 = vst [vmem:[#allocation3 + $0x128] sm:$0xff] %v1670
  %1682 = vst [vmem:[#allocation3 + $0x130] sm:$0xff] %v1671
  %1683 = vst [vmem:[#allocation3 + $0x138] sm:$0xff] %v1672
  %1684 = vst [vmem:[#allocation3 + $0x140] sm:$0xff] %v1673
  %1685 = vst.msk [vmem:[#allocation3 + $0x148] sm:$0xff] %vm91, %v1668
  %v1686 = vld [vmem:[#allocation2] sm:$0xff]
  %v1687 = vld [vmem:[#allocation2 + $0x8] sm:$0xff]
  %v1688 = vld [vmem:[#allocation2 + $0x10] sm:$0xff]
  %v1689 = vld [vmem:[#allocation2 + $0x18] sm:$0xff]
  %v1690 = vld [vmem:[#allocation2 + $0x20] sm:$0xff]
  %v1691 = vld [vmem:[#allocation2 + $0x28] sm:$0xff]
  %1698 = vrot.lane.b32.xlu0 %v1686, 91
  %v1699 = vpop.permute.xlu0 %1698
  %1700 = vrot.lane.b32.xlu0 %v1687, 91
  %v1701 = vpop.permute.xlu0 %1700
  %1702 = vrot.lane.b32.xlu0 %v1688, 91
  %v1703 = vpop.permute.xlu0 %1702
  %1704 = vrot.lane.b32.xlu0 %v1689, 91
  %v1705 = vpop.permute.xlu0 %1704
  %1706 = vrot.lane.b32.xlu0 %v1690, 91
  %v1707 = vpop.permute.xlu0 %1706
  %1708 = vrot.lane.b32.xlu0 %v1691, 91
  %v1709 = vpop.permute.xlu0 %1708
  %v1710 = vsel %vm369, %v1699, %v1701
  %v1711 = vsel %vm369, %v1701, %v1703
  %v1712 = vsel %vm369, %v1703, %v1705
  %v1713 = vsel %vm369, %v1705, %v1707
  %v1714 = vsel %vm369, %v1707, %v1709
  %1721 = vst [vmem:[#allocation3 + $0x150] sm:$0xff] %v1710
  %1722 = vst [vmem:[#allocation3 + $0x158] sm:$0xff] %v1711
  %1723 = vst [vmem:[#allocation3 + $0x160] sm:$0xff] %v1712
  %1724 = vst [vmem:[#allocation3 + $0x168] sm:$0xff] %v1713
  %1725 = vst [vmem:[#allocation3 + $0x170] sm:$0xff] %v1714
  %1726 = vst.msk [vmem:[#allocation3 + $0x178] sm:$0xff] %vm91, %v1709
  %v1727 = vld [vmem:[#allocation2] sm:$0xff]
  %v1728 = vld [vmem:[#allocation2 + $0x8] sm:$0xff]
  %v1729 = vld [vmem:[#allocation2 + $0x10] sm:$0xff]
  %v1730 = vld [vmem:[#allocation2 + $0x18] sm:$0xff]
  %v1731 = vld [vmem:[#allocation2 + $0x20] sm:$0xff]
  %v1732 = vld [vmem:[#allocation2 + $0x28] sm:$0xff]
  %1739 = vrot.lane.b32.xlu0 %v1727, 90
  %v1740 = vpop.permute.xlu0 %1739
  %1741 = vrot.lane.b32.xlu0 %v1728, 90
  %v1742 = vpop.permute.xlu0 %1741
  %1743 = vrot.lane.b32.xlu0 %v1729, 90
  %v1744 = vpop.permute.xlu0 %1743
  %1745 = vrot.lane.b32.xlu0 %v1730, 90
  %v1746 = vpop.permute.xlu0 %1745
  %1747 = vrot.lane.b32.xlu0 %v1731, 90
  %v1748 = vpop.permute.xlu0 %1747
  %1749 = vrot.lane.b32.xlu0 %v1732, 90
  %v1750 = vpop.permute.xlu0 %1749
  %v1751 = vsel %vm411, %v1740, %v1742
  %v1752 = vsel %vm411, %v1742, %v1744
  %v1753 = vsel %vm411, %v1744, %v1746
  %v1754 = vsel %vm411, %v1746, %v1748
  %v1755 = vsel %vm411, %v1748, %v1750
  %1762 = vst [vmem:[#allocation3 + $0x180] sm:$0xff] %v1751
  %1763 = vst [vmem:[#allocation3 + $0x188] sm:$0xff] %v1752
  %1764 = vst [vmem:[#allocation3 + $0x190] sm:$0xff] %v1753
  %1765 = vst [vmem:[#allocation3 + $0x198] sm:$0xff] %v1754
  %1766 = vst [vmem:[#allocation3 + $0x1a0] sm:$0xff] %v1755
  %1767 = vst.msk [vmem:[#allocation3 + $0x1a8] sm:$0xff] %vm91, %v1750
  %v1768 = vld [vmem:[%s6] sm:$0xff]
  %v1769 = vld [vmem:[#allocation3] sm:$0xff]
  %v1770 = vld [vmem:[#allocation3 + $0x8] sm:$0xff]
  %v1771 = vld [vmem:[#allocation3 + $0x10] sm:$0xff]
  %v1772 = vld [vmem:[#allocation3 + $0x18] sm:$0xff]
  %v1773 = vld [vmem:[#allocation3 + $0x20] sm:$0xff]
  %v1774 = vld [vmem:[#allocation3 + $0x28] sm:$0xff]
  %v1775 = vld [vmem:[#allocation3 + $0x30] sm:$0xff]
  %v1776 = vld [vmem:[#allocation3 + $0x38] sm:$0xff]
  %v1777 = vld [vmem:[#allocation3 + $0x40] sm:$0xff]
  %v1778 = vld [vmem:[#allocation3 + $0x48] sm:$0xff]
  %v1779 = vld [vmem:[#allocation3 + $0x50] sm:$0xff]
  %v1780 = vld [vmem:[#allocation3 + $0x58] sm:$0xff]
  %v1781 = vld [vmem:[#allocation3 + $0x60] sm:$0xff]
  %v1782 = vld [vmem:[#allocation3 + $0x68] sm:$0xff]
  %v1783 = vld [vmem:[#allocation3 + $0x70] sm:$0xff]
  %v1784 = vld [vmem:[#allocation3 + $0x78] sm:$0xff]
  %v1785 = vld [vmem:[#allocation3 + $0x80] sm:$0xff]
  %v1786 = vld [vmem:[#allocation3 + $0x88] sm:$0xff]
  %v1787 = vld [vmem:[#allocation3 + $0x90] sm:$0xff]
  %v1788 = vld [vmem:[#allocation3 + $0x98] sm:$0xff]
  %v1789 = vld [vmem:[#allocation3 + $0xa0] sm:$0xff]
  %v1790 = vld [vmem:[#allocation3 + $0xa8] sm:$0xff]
  %v1791 = vld [vmem:[#allocation3 + $0xb0] sm:$0xff]
  %v1792 = vld [vmem:[#allocation3 + $0xb8] sm:$0xff]
  %v1793 = vld [vmem:[#allocation3 + $0xc0] sm:$0xff]
  %v1794 = vld [vmem:[#allocation3 + $0xc8] sm:$0xff]
  %v1795 = vld [vmem:[#allocation3 + $0xd0] sm:$0xff]
  %v1796 = vld [vmem:[#allocation3 + $0xd8] sm:$0xff]
  %v1797 = vld [vmem:[#allocation3 + $0xe0] sm:$0xff]
  %v1798 = vld [vmem:[#allocation3 + $0xe8] sm:$0xff]
  %v1799 = vld [vmem:[#allocation3 + $0xf0] sm:$0xff]
  %v1800 = vld [vmem:[#allocation3 + $0xf8] sm:$0xff]
  %v1801 = vld [vmem:[#allocation3 + $0x100] sm:$0xff]
  %v1802 = vld [vmem:[#allocation3 + $0x108] sm:$0xff]
  %v1803 = vld [vmem:[#allocation3 + $0x110] sm:$0xff]
  %v1804 = vld [vmem:[#allocation3 + $0x118] sm:$0xff]
  %v1805 = vld [vmem:[#allocation3 + $0x120] sm:$0xff]
  %v1806 = vld [vmem:[#allocation3 + $0x128] sm:$0xff]
  %v1807 = vld [vmem:[#allocation3 + $0x130] sm:$0xff]
  %v1808 = vld [vmem:[#allocation3 + $0x138] sm:$0xff]
  %v1809 = vld [vmem:[#allocation3 + $0x140] sm:$0xff]
  %v1810 = vld [vmem:[#allocation3 + $0x148] sm:$0xff]
  %v1811 = vld [vmem:[#allocation3 + $0x150] sm:$0xff]
  %v1812 = vld [vmem:[#allocation3 + $0x158] sm:$0xff]
  %v1813 = vld [vmem:[#allocation3 + $0x160] sm:$0xff]
  %v1814 = vld [vmem:[#allocation3 + $0x168] sm:$0xff]
  %v1815 = vld [vmem:[#allocation3 + $0x170] sm:$0xff]
  %v1816 = vld [vmem:[#allocation3 + $0x178] sm:$0xff]
  %v1817 = vld [vmem:[#allocation3 + $0x180] sm:$0xff]
  %v1818 = vld [vmem:[#allocation3 + $0x188] sm:$0xff]
  %v1819 = vld [vmem:[#allocation3 + $0x190] sm:$0xff]
  %v1820 = vld [vmem:[#allocation3 + $0x198] sm:$0xff]
  %v1821 = vld [vmem:[#allocation3 + $0x1a0] sm:$0xff]
  %v1822 = vld [vmem:[#allocation3 + $0x1a8] sm:$0xff]
  %v1823 = vld [vmem:[%s7] sm:$0xff]
  %1825 = vset.pattern.permute.xlu0 0
  %1826 = vperm.xlu0 %1825, %v1823
  %v1827 = vpop.permute.xlu0 %1826
  %v1830 = vsel %vm490, %v1768, 0
  %1832 = vmatprep.subr.mxu0 %v1770
  %1833 = vmatpush1.msra.mxu0 %v1769
  %1834 = vmatprep.subr.mxu0 %v1776
  %1835 = vmatpush1.msra.mxu0 %v1775
  %1836 = vmatprep.subr.mxu0 %v1782
  %1837 = vmatpush1.msra.mxu0 %v1781
  %1838 = vmatprep.subr.mxu0 %v1788
  %1839 = vmatpush1.msra.mxu0 %v1787
  %1840 = vmatprep.subr.mxu0 %v1794
  %1841 = vmatpush1.msra.mxu0 %v1793
  %1842 = vmatprep.subr.mxu0 %v1800
  %1843 = vmatpush1.msra.mxu0 %v1799
  %1844 = vmatprep.subr.mxu0 %v1806
  %1845 = vmatpush1.msra.mxu0 %v1805
  %1846 = vmatprep.subr.mxu0 %v1812
  %1847 = vmatpush1.msra.mxu0 %v1811
  %1848 = vmatprep.subr.mxu0 %v1818
  %1849 = vmatpush1.msra.mxu0 %v1817
  %1850 = vmatprep.subr.mxu0 0.0
  %1851 = vmatpush1.msra.mxu0 0.0
  %1852 = vmatprep.subr.mxu0 0.0
  %1853 = vmatpush1.msra.mxu0 0.0
  %1854 = vmatprep.subr.mxu0 0.0
  %1855 = vmatpush1.msra.mxu0 0.0
  %1856 = vmatprep.subr.mxu0 0.0
  %1857 = vmatpush1.msra.mxu0 0.0
  %1858 = vmatprep.subr.mxu0 0.0
  %1859 = vmatpush1.msra.mxu0 0.0
  %1860 = vmatprep.subr.mxu0 0.0
  %1861 = vmatpush1.msra.mxu0 0.0
  %1862 = vmatprep.subr.mxu0 0.0
  %1863 = vmatpush1.msra.mxu0 0.0
  %1864 = vmatprep.subr.mxu0 0.0
  %1865 = vmatpush1.msra.mxu0 0.0
  %1866 = vmatprep.subr.mxu0 0.0
  %1867 = vmatpush1.msra.mxu0 0.0
  %1868 = vmatprep.subr.mxu0 0.0
  %1869 = vmatpush1.msra.mxu0 0.0
  %1870 = vmatprep.subr.mxu0 0.0
  %1871 = vmatpush1.msra.mxu0 0.0
  %1872 = vmatprep.subr.mxu0 0.0
  %1873 = vmatpush1.msra.mxu0 0.0
  %1874 = vmatprep.subr.mxu0 0.0
  %1875 = vmatpush1.msra.mxu0 0.0
  %1876 = vmatprep.subr.mxu0 0.0
  %1877 = vmatpush1.msra.mxu0 0.0
  %1878 = vmatprep.subr.mxu0 0.0
  %1879 = vmatpush1.msra.mxu0 0.0
  %1880 = vmatprep.subr.mxu0 0.0
  %1881 = vmatpush1.msra.mxu0 0.0
  %1882 = vmatprep.subr.mxu0 0.0
  %1883 = vmatpush1.msra.mxu0 0.0
  %1884 = vmatprep.subr.mxu0 0.0
  %1885 = vmatpush1.msra.mxu0 0.0
  %1886 = vmatprep.subr.mxu0 0.0
  %1887 = vmatpush1.msra.mxu0 0.0
  %1888 = vmatprep.subr.mxu0 0.0
  %1889 = vmatpush1.msra.mxu0 0.0
  %1890 = vmatprep.subr.mxu0 0.0
  %1891 = vmatpush1.msra.mxu0 0.0
  %1892 = vmatprep.subr.mxu0 0.0
  %1893 = vmatpush1.msra.mxu0 0.0
  %1894 = vmatprep.subr.mxu0 0.0
  %1895 = vmatpush1.msra.mxu0 0.0
  %1896 = vmatprep.mubr.f32.mxu0 0.0
  %1897 = vmatmul.mubr.f32.gmra.mrb[0].mxu0 %v1830
  %v1898 = vpop.f32.mrb[0].mxu0
  %v1899 = vadd.f32 %v1827, %v1898
  %v1900 = vpop.f32.mrb[0].mxu0
  %v1901 = vadd.f32 %v1827, %v1900
  %1902 = vdwg.mxu0
  %1903 = vmatprep.subr.mxu0 %v1772
  %1904 = vmatpush1.msra.mxu0 %v1771
  %1905 = vmatprep.subr.mxu0 %v1778
  %1906 = vmatpush1.msra.mxu0 %v1777
  %1907 = vmatprep.subr.mxu0 %v1784
  %1908 = vmatpush1.msra.mxu0 %v1783
  %1909 = vmatprep.subr.mxu0 %v1790
  %1910 = vmatpush1.msra.mxu0 %v1789
  %1911 = vmatprep.subr.mxu0 %v1796
  %1912 = vmatpush1.msra.mxu0 %v1795
  %1913 = vmatprep.subr.mxu0 %v1802
  %1914 = vmatpush1.msra.mxu0 %v1801
  %1915 = vmatprep.subr.mxu0 %v1808
  %1916 = vmatpush1.msra.mxu0 %v1807
  %1917 = vmatprep.subr.mxu0 %v1814
  %1918 = vmatpush1.msra.mxu0 %v1813
  %1919 = vmatprep.subr.mxu0 %v1820
  %1920 = vmatpush1.msra.mxu0 %v1819
  %1921 = vmatprep.subr.mxu0 0.0
  %1922 = vmatpush1.msra.mxu0 0.0
  %1923 = vmatprep.subr.mxu0 0.0
  %1924 = vmatpush1.msra.mxu0 0.0
  %1925 = vmatprep.subr.mxu0 0.0
  %1926 = vmatpush1.msra.mxu0 0.0
  %1927 = vmatprep.subr.mxu0 0.0
  %1928 = vmatpush1.msra.mxu0 0.0
  %1929 = vmatprep.subr.mxu0 0.0
  %1930 = vmatpush1.msra.mxu0 0.0
  %1931 = vmatprep.subr.mxu0 0.0
  %1932 = vmatpush1.msra.mxu0 0.0
  %1933 = vmatprep.subr.mxu0 0.0
  %1934 = vmatpush1.msra.mxu0 0.0
  %1935 = vmatprep.subr.mxu0 0.0
  %1936 = vmatpush1.msra.mxu0 0.0
  %1937 = vmatprep.subr.mxu0 0.0
  %1938 = vmatpush1.msra.mxu0 0.0
  %1939 = vmatprep.subr.mxu0 0.0
  %1940 = vmatpush1.msra.mxu0 0.0
  %1941 = vmatprep.subr.mxu0 0.0
  %1942 = vmatpush1.msra.mxu0 0.0
  %1943 = vmatprep.subr.mxu0 0.0
  %1944 = vmatpush1.msra.mxu0 0.0
  %1945 = vmatprep.subr.mxu0 0.0
  %1946 = vmatpush1.msra.mxu0 0.0
  %1947 = vmatprep.subr.mxu0 0.0
  %1948 = vmatpush1.msra.mxu0 0.0
  %1949 = vmatprep.subr.mxu0 0.0
  %1950 = vmatpush1.msra.mxu0 0.0
  %1951 = vmatprep.subr.mxu0 0.0
  %1952 = vmatpush1.msra.mxu0 0.0
  %1953 = vmatprep.subr.mxu0 0.0
  %1954 = vmatpush1.msra.mxu0 0.0
  %1955 = vmatprep.subr.mxu0 0.0
  %1956 = vmatpush1.msra.mxu0 0.0
  %1957 = vmatprep.subr.mxu0 0.0
  %1958 = vmatpush1.msra.mxu0 0.0
  %1959 = vmatprep.subr.mxu0 0.0
  %1960 = vmatpush1.msra.mxu0 0.0
  %1961 = vmatprep.subr.mxu0 0.0
  %1962 = vmatpush1.msra.mxu0 0.0
  %1963 = vmatprep.subr.mxu0 0.0
  %1964 = vmatpush1.msra.mxu0 0.0
  %1965 = vmatprep.subr.mxu0 0.0
  %1966 = vmatpush1.msra.mxu0 0.0
  %1967 = vmatprep.mubr.f32.mxu0 0.0
  %1968 = vmatmul.mubr.f32.gmra.mrb[0].mxu0 %v1830
  %v1969 = vpop.f32.mrb[0].mxu0
  %v1970 = vadd.f32 %v1827, %v1969
  %v1971 = vpop.f32.mrb[0].mxu0
  %v1972 = vadd.f32 %v1827, %v1971
  %1973 = vdwg.mxu0
  %1974 = vmatprep.subr.mxu0 %v1774
  %1975 = vmatpush1.msra.mxu0 %v1773
  %1976 = vmatprep.subr.mxu0 %v1780
  %1977 = vmatpush1.msra.mxu0 %v1779
  %1978 = vmatprep.subr.mxu0 %v1786
  %1979 = vmatpush1.msra.mxu0 %v1785
  %1980 = vmatprep.subr.mxu0 %v1792
  %1981 = vmatpush1.msra.mxu0 %v1791
  %1982 = vmatprep.subr.mxu0 %v1798
  %1983 = vmatpush1.msra.mxu0 %v1797
  %1984 = vmatprep.subr.mxu0 %v1804
  %1985 = vmatpush1.msra.mxu0 %v1803
  %1986 = vmatprep.subr.mxu0 %v1810
  %1987 = vmatpush1.msra.mxu0 %v1809
  %1988 = vmatprep.subr.mxu0 %v1816
  %1989 = vmatpush1.msra.mxu0 %v1815
  %1990 = vmatprep.subr.mxu0 %v1822
  %1991 = vmatpush1.msra.mxu0 %v1821
  %1992 = vmatprep.subr.mxu0 0.0
  %1993 = vmatpush1.msra.mxu0 0.0
  %1994 = vmatprep.subr.mxu0 0.0
  %1995 = vmatpush1.msra.mxu0 0.0
  %1996 = vmatprep.subr.mxu0 0.0
  %1997 = vmatpush1.msra.mxu0 0.0
  %1998 = vmatprep.subr.mxu0 0.0
  %1999 = vmatpush1.msra.mxu0 0.0
  %2000 = vmatprep.subr.mxu0 0.0
  %2001 = vmatpush1.msra.mxu0 0.0
  %2002 = vmatprep.subr.mxu0 0.0
  %2003 = vmatpush1.msra.mxu0 0.0
  %2004 = vmatprep.subr.mxu0 0.0
  %2005 = vmatpush1.msra.mxu0 0.0
  %2006 = vmatprep.subr.mxu0 0.0
  %2007 = vmatpush1.msra.mxu0 0.0
  %2008 = vmatprep.subr.mxu0 0.0
  %2009 = vmatpush1.msra.mxu0 0.0
  %2010 = vmatprep.subr.mxu0 0.0
  %2011 = vmatpush1.msra.mxu0 0.0
  %2012 = vmatprep.subr.mxu0 0.0
  %2013 = vmatpush1.msra.mxu0 0.0
  %2014 = vmatprep.subr.mxu0 0.0
  %2015 = vmatpush1.msra.mxu0 0.0
  %2016 = vmatprep.subr.mxu0 0.0
  %2017 = vmatpush1.msra.mxu0 0.0
  %2018 = vmatprep.subr.mxu0 0.0
  %2019 = vmatpush1.msra.mxu0 0.0
  %2020 = vmatprep.subr.mxu0 0.0
  %2021 = vmatpush1.msra.mxu0 0.0
  %2022 = vmatprep.subr.mxu0 0.0
  %2023 = vmatpush1.msra.mxu0 0.0
  %2024 = vmatprep.subr.mxu0 0.0
  %2025 = vmatpush1.msra.mxu0 0.0
  %2026 = vmatprep.subr.mxu0 0.0
  %2027 = vmatpush1.msra.mxu0 0.0
  %2028 = vmatprep.subr.mxu0 0.0
  %2029 = vmatpush1.msra.mxu0 0.0
  %2030 = vmatprep.subr.mxu0 0.0
  %2031 = vmatpush1.msra.mxu0 0.0
  %2032 = vmatprep.subr.mxu0 0.0
  %2033 = vmatpush1.msra.mxu0 0.0
  %2034 = vmatprep.subr.mxu0 0.0
  %2035 = vmatpush1.msra.mxu0 0.0
  %2036 = vmatprep.subr.mxu0 0.0
  %2037 = vmatpush1.msra.mxu0 0.0
  %2038 = vmatprep.mubr.f32.mxu0 0.0
  %2039 = vmatmul.mubr.f32.gmra.mrb[0].mxu0 %v1830
  %v2040 = vpop.f32.mrb[0].mxu0
  %v2041 = vadd.f32 %v1827, %v2040
  %v2042 = vpop.f32.mrb[0].mxu0
  %v2043 = vadd.f32 %v1827, %v2042
  %2044 = vdwg.mxu0
  %v2045 = vadd.f32 %v713, %v1899
  %v2046 = vadd.f32 %v714, %v1901
  %v2047 = vadd.f32 %v715, %v1970
  %v2048 = vadd.f32 %v716, %v1972
  %v2049 = vadd.f32 %v717, %v2041
  %v2050 = vadd.f32 %v718, %v2043
  %v2051 = vmax.f32 %v2045, 0.0
  %v2052 = vmax.f32 %v2046, 0.0
  %v2053 = vmax.f32 %v2047, 0.0
  %v2054 = vmax.f32 %v2048, 0.0
  %v2055 = vmax.f32 %v2049, 0.0
  %v2056 = vmax.f32 %v2050, 0.0
  %v2057 = vsel %vm74, %v2051, 0.0
  %v2058 = vsel %vm75, %v2052, 0.0
  %v2059 = vsel %vm76, %v2053, 0.0
  %v2060 = vsel %vm77, %v2054, 0.0
  %v2061 = vsel %vm78, %v2055, 0.0
  %v2062 = vsel %vm79, %v2056, 0.0
  %v2063 = vadd.f32 %v2057, %v2058
  %vm2064 = vcmask 556032
  %v2065 = vsel %vm2064, %v2059, 0.0
  %v2066 = vadd.f32 %v2063, %v2065
  %2067 = vadd.xlane.f32.xlu0 %v2066
  %v2068 = vpop.xlane.xlu0 %2067
  %v2069 = vmul.f32 %v2068, 0.00390625
  %2074 = vrot.lane.b32.xlu0 %v2059, 60
  %v2075 = vpop.permute.xlu0 %2074
  %2076 = vrot.lane.b32.xlu0 %v2060, 60
  %v2077 = vpop.permute.xlu0 %2076
  %2078 = vrot.lane.b32.xlu0 %v2061, 60
  %v2079 = vpop.permute.xlu0 %2078
  %2080 = vrot.lane.b32.xlu0 %v2062, 60
  %v2081 = vpop.permute.xlu0 %2080
  %vm2082 = vcmask 490496
  %v2083 = vsel %vm2082, %v2075, %v2077
  %v2084 = vsel %vm2082, %v2077, %v2079
  %v2085 = vsel %vm2082, %v2079, %v2081
  %v2089 = vadd.f32 %v2083, %v2084
  %v2090 = vsel %vm2064, %v2085, 0.0
  %v2091 = vadd.f32 %v2089, %v2090
  %2092 = vadd.xlane.f32.xlu0 %v2091
  %v2093 = vpop.xlane.xlu0 %2092
  %v2094 = vmul.f32 %v2093, 0.00390625
  %vm2095 = vcmask 7168
  %v2096 = vsel %vm2095, %v2069, %v2094
  %v2097 = vld [vmem:[%s8] sm:$0xff]
  %v2098 = vld [vmem:[%s8 + $0x8] sm:$0xff]
  %v2099 = vld [vmem:[%s8 + $0x10] sm:$0xff]
  %v2100 = vld [vmem:[%s8 + $0x18] sm:$0xff]
  %v2101 = vld [vmem:[%s9] sm:$0xff]
  %v2102 = vld [vmem:[%s9 + $0x8] sm:$0xff]
  %v2103 = vld [vmem:[%s9 + $0x10] sm:$0xff]
  %v2104 = vld [vmem:[%s9 + $0x18] sm:$0xff]
  %2106 = vset.pattern.permute.xlu0 0
  %2107 = vperm.xlu0 %2106, %v2101
  %v2108 = vpop.permute.xlu0 %2107
  %2111 = vset.pattern.permute.xlu0 0
  %2112 = vperm.xlu0 %2111, %v2102
  %v2113 = vpop.permute.xlu0 %2112
  %2116 = vset.pattern.permute.xlu0 0
  %2117 = vperm.xlu0 %2116, %v2103
  %v2118 = vpop.permute.xlu0 %2117
  %2121 = vset.pattern.permute.xlu0 0
  %2122 = vperm.xlu0 %2121, %v2104
  %v2123 = vpop.permute.xlu0 %2122
  %v2126 = vsel %vm91, %v2097, 0
  %v2129 = vsel %vm91, %v2098, 0
  %v2132 = vsel %vm91, %v2099, 0
  %v2135 = vsel %vm91, %v2100, 0
  %2137 = vmatprep.subr.mxu0 0.0
  %2138 = vmatpush1.msra.mxu0 %v2096
  %2139 = vmatprep.subr.mxu0 0.0
  %2140 = vmatpush1.msra.mxu0 0.0
  %2141 = vmatprep.subr.mxu0 0.0
  %2142 = vmatpush1.msra.mxu0 0.0
  %2143 = vmatprep.subr.mxu0 0.0
  %2144 = vmatpush1.msra.mxu0 0.0
  %2145 = vmatprep.subr.mxu0 0.0
  %2146 = vmatpush1.msra.mxu0 0.0
  %2147 = vmatprep.subr.mxu0 0.0
  %2148 = vmatpush1.msra.mxu0 0.0
  %2149 = vmatprep.subr.mxu0 0.0
  %2150 = vmatpush1.msra.mxu0 0.0
  %2151 = vmatprep.subr.mxu0 0.0
  %2152 = vmatpush1.msra.mxu0 0.0
  %2153 = vmatprep.subr.mxu0 0.0
  %2154 = vmatpush1.msra.mxu0 0.0
  %2155 = vmatprep.subr.mxu0 0.0
  %2156 = vmatpush1.msra.mxu0 0.0
  %2157 = vmatprep.subr.mxu0 0.0
  %2158 = vmatpush1.msra.mxu0 0.0
  %2159 = vmatprep.subr.mxu0 0.0
  %2160 = vmatpush1.msra.mxu0 0.0
  %2161 = vmatprep.subr.mxu0 0.0
  %2162 = vmatpush1.msra.mxu0 0.0
  %2163 = vmatprep.subr.mxu0 0.0
  %2164 = vmatpush1.msra.mxu0 0.0
  %2165 = vmatprep.subr.mxu0 0.0
  %2166 = vmatpush1.msra.mxu0 0.0
  %2167 = vmatprep.subr.mxu0 0.0
  %2168 = vmatpush1.msra.mxu0 0.0
  %2169 = vmatprep.subr.mxu0 0.0
  %2170 = vmatpush1.msra.mxu0 0.0
  %2171 = vmatprep.subr.mxu0 0.0
  %2172 = vmatpush1.msra.mxu0 0.0
  %2173 = vmatprep.subr.mxu0 0.0
  %2174 = vmatpush1.msra.mxu0 0.0
  %2175 = vmatprep.subr.mxu0 0.0
  %2176 = vmatpush1.msra.mxu0 0.0
  %2177 = vmatprep.subr.mxu0 0.0
  %2178 = vmatpush1.msra.mxu0 0.0
  %2179 = vmatprep.subr.mxu0 0.0
  %2180 = vmatpush1.msra.mxu0 0.0
  %2181 = vmatprep.subr.mxu0 0.0
  %2182 = vmatpush1.msra.mxu0 0.0
  %2183 = vmatprep.subr.mxu0 0.0
  %2184 = vmatpush1.msra.mxu0 0.0
  %2185 = vmatprep.subr.mxu0 0.0
  %2186 = vmatpush1.msra.mxu0 0.0
  %2187 = vmatprep.subr.mxu0 0.0
  %2188 = vmatpush1.msra.mxu0 0.0
  %2189 = vmatprep.subr.mxu0 0.0
  %2190 = vmatpush1.msra.mxu0 0.0
  %2191 = vmatprep.subr.mxu0 0.0
  %2192 = vmatpush1.msra.mxu0 0.0
  %2193 = vmatprep.subr.mxu0 0.0
  %2194 = vmatpush1.msra.mxu0 0.0
  %2195 = vmatprep.subr.mxu0 0.0
  %2196 = vmatpush1.msra.mxu0 0.0
  %2197 = vmatprep.subr.mxu0 0.0
  %2198 = vmatpush1.msra.mxu0 0.0
  %2199 = vmatprep.subr.mxu0 0.0
  %2200 = vmatpush1.msra.mxu0 0.0
  %2201 = vmatprep.mubr.f32.mxu0 0.0
  %2202 = vmatmul.mubr.f32.gmra.mrb[0].mxu0 %v2126
  %v2203 = vpop.f32.mrb[0].mxu0
  %v2204 = vadd.f32 %v2108, %v2203
  %v2205 = vpop.f32.mrb[0].mxu0
  %2206 = vmatprep.mubr.f32.mxu0 0.0
  %2207 = vmatmul.mubr.f32.gmra.mrb[0].mxu0 %v2129
  %v2208 = vpop.f32.mrb[0].mxu0
  %v2209 = vadd.f32 %v2113, %v2208
  %v2210 = vpop.f32.mrb[0].mxu0
  %2211 = vmatprep.mubr.f32.mxu0 0.0
  %2212 = vmatmul.mubr.f32.gmra.mrb[0].mxu0 %v2132
  %v2213 = vpop.f32.mrb[0].mxu0
  %v2214 = vadd.f32 %v2118, %v2213
  %v2215 = vpop.f32.mrb[0].mxu0
  %2216 = vmatprep.mubr.f32.mxu0 0.0
  %2217 = vmatmul.mubr.f32.gmra.mrb[0].mxu0 %v2135
  %v2218 = vpop.f32.mrb[0].mxu0
  %v2219 = vadd.f32 %v2123, %v2218
  %v2220 = vpop.f32.mrb[0].mxu0
  %2221 = vdwg.mxu0
  %v2222 = vmax.f32 %v2204, 0.0
  %v2223 = vmax.f32 %v2209, 0.0
  %v2224 = vmax.f32 %v2214, 0.0
  %v2225 = vmax.f32 %v2219, 0.0
  %v2226 = vld [vmem:[%s10] sm:$0xff]
  %v2227 = vld [vmem:[%s10 + $0x8] sm:$0xff]
  %v2228 = vld [vmem:[%s11] sm:$0xff]
  %v2229 = vld [vmem:[%s11 + $0x8] sm:$0xff]
  %2231 = vset.pattern.permute.xlu0 0
  %2232 = vperm.xlu0 %2231, %v2228
  %v2233 = vpop.permute.xlu0 %2232
  %2236 = vset.pattern.permute.xlu0 0
  %2237 = vperm.xlu0 %2236, %v2229
  %v2238 = vpop.permute.xlu0 %2237
  %vm2240 = vcmask 261120
  %v2242 = vsel %vm2240, %v2226, 0
  %v2245 = vsel %vm2240, %v2227, 0
  %2247 = vmatprep.subr.mxu0 0.0
  %2248 = vmatpush1.msra.mxu0 %v2222
  %2249 = vmatprep.subr.mxu0 0.0
  %2250 = vmatpush1.msra.mxu0 %v2223
  %2251 = vmatprep.subr.mxu0 0.0
  %2252 = vmatpush1.msra.mxu0 %v2224
  %2253 = vmatprep.subr.mxu0 0.0
  %2254 = vmatpush1.msra.mxu0 %v2225
  %2255 = vmatprep.subr.mxu0 0.0
  %2256 = vmatpush1.msra.mxu0 0.0
  %2257 = vmatprep.subr.mxu0 0.0
  %2258 = vmatpush1.msra.mxu0 0.0
  %2259 = vmatprep.subr.mxu0 0.0
  %2260 = vmatpush1.msra.mxu0 0.0
  %2261 = vmatprep.subr.mxu0 0.0
  %2262 = vmatpush1.msra.mxu0 0.0
  %2263 = vmatprep.subr.mxu0 0.0
  %2264 = vmatpush1.msra.mxu0 0.0
  %2265 = vmatprep.subr.mxu0 0.0
  %2266 = vmatpush1.msra.mxu0 0.0
  %2267 = vmatprep.subr.mxu0 0.0
  %2268 = vmatpush1.msra.mxu0 0.0
  %2269 = vmatprep.subr.mxu0 0.0
  %2270 = vmatpush1.msra.mxu0 0.0
  %2271 = vmatprep.subr.mxu0 0.0
  %2272 = vmatpush1.msra.mxu0 0.0
  %2273 = vmatprep.subr.mxu0 0.0
  %2274 = vmatpush1.msra.mxu0 0.0
  %2275 = vmatprep.subr.mxu0 0.0
  %2276 = vmatpush1.msra.mxu0 0.0
  %2277 = vmatprep.subr.mxu0 0.0
  %2278 = vmatpush1.msra.mxu0 0.0
  %2279 = vmatprep.subr.mxu0 0.0
  %2280 = vmatpush1.msra.mxu0 0.0
  %2281 = vmatprep.subr.mxu0 0.0
  %2282 = vmatpush1.msra.mxu0 0.0
  %2283 = vmatprep.subr.mxu0 0.0
  %2284 = vmatpush1.msra.mxu0 0.0
  %2285 = vmatprep.subr.mxu0 0.0
  %2286 = vmatpush1.msra.mxu0 0.0
  %2287 = vmatprep.subr.mxu0 0.0
  %2288 = vmatpush1.msra.mxu0 0.0
  %2289 = vmatprep.subr.mxu0 0.0
  %2290 = vmatpush1.msra.mxu0 0.0
  %2291 = vmatprep.subr.mxu0 0.0
  %2292 = vmatpush1.msra.mxu0 0.0
  %2293 = vmatprep.subr.mxu0 0.0
  %2294 = vmatpush1.msra.mxu0 0.0
  %2295 = vmatprep.subr.mxu0 0.0
  %2296 = vmatpush1.msra.mxu0 0.0
  %2297 = vmatprep.subr.mxu0 0.0
  %2298 = vmatpush1.msra.mxu0 0.0
  %2299 = vmatprep.subr.mxu0 0.0
  %2300 = vmatpush1.msra.mxu0 0.0
  %2301 = vmatprep.subr.mxu0 0.0
  %2302 = vmatpush1.msra.mxu0 0.0
  %2303 = vmatprep.subr.mxu0 0.0
  %2304 = vmatpush1.msra.mxu0 0.0
  %2305 = vmatprep.subr.mxu0 0.0
  %2306 = vmatpush1.msra.mxu0 0.0
  %2307 = vmatprep.subr.mxu0 0.0
  %2308 = vmatpush1.msra.mxu0 0.0
  %2309 = vmatprep.subr.mxu0 0.0
  %2310 = vmatpush1.msra.mxu0 0.0
  %2311 = vmatprep.mubr.f32.mxu0 0.0
  %2312 = vmatmul.mubr.f32.gmra.mrb[0].mxu0 %v2242
  %v2313 = vpop.f32.mrb[0].mxu0
  %v2314 = vadd.f32 %v2233, %v2313
  %v2315 = vpop.f32.mrb[0].mxu0
  %2316 = vmatprep.mubr.f32.mxu0 0.0
  %2317 = vmatmul.mubr.f32.gmra.mrb[0].mxu0 %v2245
  %v2318 = vpop.f32.mrb[0].mxu0
  %v2319 = vadd.f32 %v2238, %v2318
  %v2320 = vpop.f32.mrb[0].mxu0
  %2321 = vdwg.mxu0
  %v2322 = vmax.f32 %v2314, 0.0
  %v2323 = vmax.f32 %v2319, 0.0
  %v2324 = vld [vmem:[%s12] sm:$0xf]
  %v2325 = vld [vmem:[%s13] sm:$0xf]
  %2327 = vset.pattern.permute.xlu0 0
  %2328 = vperm.xlu0 %2327, %v2325
  %v2329 = vpop.permute.xlu0 %2328
  %vm2331 = vcmask 130048
  %v2333 = vsel %vm2331, %v2324, 0
  %2335 = vmatprep.subr.mxu0 0.0
  %2336 = vmatpush1.msra.mxu0 %v2322
  %2337 = vmatprep.subr.mxu0 0.0
  %2338 = vmatpush1.msra.mxu0 %v2323
  %2339 = vmatprep.subr.mxu0 0.0
  %2340 = vmatpush1.msra.mxu0 0.0
  %2341 = vmatprep.subr.mxu0 0.0
  %2342 = vmatpush1.msra.mxu0 0.0
  %2343 = vmatprep.subr.mxu0 0.0
  %2344 = vmatpush1.msra.mxu0 0.0
  %2345 = vmatprep.subr.mxu0 0.0
  %2346 = vmatpush1.msra.mxu0 0.0
  %2347 = vmatprep.subr.mxu0 0.0
  %2348 = vmatpush1.msra.mxu0 0.0
  %2349 = vmatprep.subr.mxu0 0.0
  %2350 = vmatpush1.msra.mxu0 0.0
  %2351 = vmatprep.subr.mxu0 0.0
  %2352 = vmatpush1.msra.mxu0 0.0
  %2353 = vmatprep.subr.mxu0 0.0
  %2354 = vmatpush1.msra.mxu0 0.0
  %2355 = vmatprep.subr.mxu0 0.0
  %2356 = vmatpush1.msra.mxu0 0.0
  %2357 = vmatprep.subr.mxu0 0.0
  %2358 = vmatpush1.msra.mxu0 0.0
  %2359 = vmatprep.subr.mxu0 0.0
  %2360 = vmatpush1.msra.mxu0 0.0
  %2361 = vmatprep.subr.mxu0 0.0
  %2362 = vmatpush1.msra.mxu0 0.0
  %2363 = vmatprep.subr.mxu0 0.0
  %2364 = vmatpush1.msra.mxu0 0.0
  %2365 = vmatprep.subr.mxu0 0.0
  %2366 = vmatpush1.msra.mxu0 0.0
  %2367 = vmatprep.subr.mxu0 0.0
  %2368 = vmatpush1.msra.mxu0 0.0
  %2369 = vmatprep.subr.mxu0 0.0
  %2370 = vmatpush1.msra.mxu0 0.0
  %2371 = vmatprep.subr.mxu0 0.0
  %2372 = vmatpush1.msra.mxu0 0.0
  %2373 = vmatprep.subr.mxu0 0.0
  %2374 = vmatpush1.msra.mxu0 0.0
  %2375 = vmatprep.subr.mxu0 0.0
  %2376 = vmatpush1.msra.mxu0 0.0
  %2377 = vmatprep.subr.mxu0 0.0
  %2378 = vmatpush1.msra.mxu0 0.0
  %2379 = vmatprep.subr.mxu0 0.0
  %2380 = vmatpush1.msra.mxu0 0.0
  %2381 = vmatprep.subr.mxu0 0.0
  %2382 = vmatpush1.msra.mxu0 0.0
  %2383 = vmatprep.subr.mxu0 0.0
  %2384 = vmatpush1.msra.mxu0 0.0
  %2385 = vmatprep.subr.mxu0 0.0
  %2386 = vmatpush1.msra.mxu0 0.0
  %2387 = vmatprep.subr.mxu0 0.0
  %2388 = vmatpush1.msra.mxu0 0.0
  %2389 = vmatprep.subr.mxu0 0.0
  %2390 = vmatpush1.msra.mxu0 0.0
  %2391 = vmatprep.subr.mxu0 0.0
  %2392 = vmatpush1.msra.mxu0 0.0
  %2393 = vmatprep.subr.mxu0 0.0
  %2394 = vmatpush1.msra.mxu0 0.0
  %2395 = vmatprep.subr.mxu0 0.0
  %2396 = vmatpush1.msra.mxu0 0.0
  %2397 = vmatprep.subr.mxu0 0.0
  %2398 = vmatpush1.msra.mxu0 0.0
  %2399 = vmatprep.mubr.f32.mxu0 0.0
  %2400 = vmatmul.mubr.f32.gmra.mrb[0].mxu0 %v2333
  %v2401 = vpop.f32.mrb[0].mxu0
  %v2402 = vadd.f32 %v2329, %v2401
  %v2403 = vpop.f32.mrb[0].mxu0
  %2404 = vdwg.mxu0
  %v2405 = vmax.f32 %v2402, 0.0
  %vm2406 = vcmask 11264
  %2407 = vst.msk [vmem:[%s14] sm:$0xf] %vm2406, %v2405
  // Predicated region
  $region58: #{custom_resnet_forward.1} parent=0 // pred_check
    _
  $region59: #{custom_resnet_forward.1} parent=0 // pred_check_branch
    %2409 = sbr.rel (0) target = $region61
  $region60: #{custom_resnet_forward.1} parent=0 // pred_region
    _
  $region61: #{custom_resnet_forward.1} parent=0 // pred_fallthru
    _
  // Predicated region
  $region62: #{custom_resnet_forward.1} parent=0 // pred_check
    _
  $region63: #{custom_resnet_forward.1} parent=0 // pred_check_branch
    %2411 = sbr.rel (0) target = $region65
  $region64: #{custom_resnet_forward.1} parent=0 // pred_region
    _
  $region65: #{custom_resnet_forward.1} parent=0 // pred_fallthru
    _

</llo_original>
